<compile_context>
chip_gen: v6e
topology: v6e:2x2x1
jax: 0.10.0
libtpu: 0.0.40
codegen_flags: <defaults>
</compile_context>

<pallas_src>
import functools

import jax
import jax.numpy as jnp
from jax.experimental import pallas as pl
from jax.experimental.pallas import tpu as pltpu

BN_EPS = 1e-5
LANE = 128


# ----------------------------- kernel helpers ----------------------------- #

def _l1_pre(x, w_ref):
    """First Linear layer (K = C_in, tiny): rank-1 VPU multiply-adds, no MXU."""
    w = w_ref[...]                                        # (C_in, C1) f32
    acc = x[:, 0:1] * w[0:1, :]
    for c in range(1, x.shape[1]):
        acc = acc + x[:, c:c + 1] * w[c:c + 1, :]
    return acc                                            # (TM, C1) f32


def _mm(a, w_ref):
    """bf16 operands, f32 accumulation on the MXU."""
    return jnp.dot(a.astype(jnp.bfloat16), w_ref[...],
                   preferred_element_type=jnp.float32)


def _bn_relu(h, s_ref, g_ref, b_ref, inv_m, bf16_elem):
    """Training-mode BatchNorm (s_ref row0 = mean, row1 = M2) + ReLU."""
    mean = s_ref[0:1, :]
    var = s_ref[1:2, :] * inv_m                           # biased variance, f32
    scale = g_ref[...] * jax.lax.rsqrt(var + BN_EPS)      # rsqrt -> EUP slot
    shift = b_ref[...] - mean * scale
    if bf16_elem:                                         # packed-bf16 VPU (v6e/v7x)
        y = (h.astype(jnp.bfloat16) * scale.astype(jnp.bfloat16)
             + shift.astype(jnp.bfloat16))
        return jnp.maximum(y, 0.0)
    return jnp.maximum(h * scale + shift, 0.0)            # f32 path (v5e/v4)


def _accum_stats(s_ref, h, t, tm):
    """Streaming per-channel mean / M2: per-tile centering + Chan combine."""
    tile_mean = jnp.sum(h, axis=0, keepdims=True) * (1.0 / tm)
    centered = h - tile_mean
    tile_m2 = jnp.sum(centered * centered, axis=0, keepdims=True)

    @pl.when(t == 0)
    def _():
        s_ref[0:1, :] = tile_mean
        s_ref[1:2, :] = tile_m2

    @pl.when(t != 0)
    def _():
        n_a = (t * tm).astype(jnp.float32)                # rows already accumulated
        frac = tm / (n_a + tm)
        mean_a = s_ref[0:1, :]
        delta = tile_mean - mean_a
        s_ref[0:1, :] = mean_a + delta * frac
        s_ref[1:2, :] = s_ref[1:2, :] + tile_m2 + delta * delta * (n_a * frac)


def _encoder_pf(x, ew1, eg1, ebe1, ew2, eg2, ebe2, s1, s2, inv_m, bf16_elem):
    h1 = _bn_relu(_l1_pre(x, ew1), s1, eg1, ebe1, inv_m, bf16_elem)
    return _bn_relu(_mm(h1, ew2), s2, eg2, ebe2, inv_m, bf16_elem)  # point feats


def _d1_pre(pf, dw1p, dw1g, n_pts, cpt):
    """Decoder Lin1 pre-activation: split matmul + tile-local per-cloud max."""
    cf = pf.shape[-1]
    pf32 = pf.astype(jnp.float32)                         # reduce/reshape in f32 layout
    gmax = jnp.max(pf32.reshape(cpt, n_pts, cf), axis=1)  # (clouds, Cf)
    jp = _mm(pf, dw1p)                                    # (TM, C1) f32
    jg = jnp.dot(gmax.astype(jnp.bfloat16), dw1g[...],
                 preferred_element_type=jnp.float32)      # (clouds, C1)
    c1 = jp.shape[-1]
    # Implicit sublane broadcast of the per-cloud term (no (TM, C1) temp).
    return (jp.reshape(cpt, n_pts, c1) + jg[:, None, :]).reshape(cpt * n_pts, c1)


# -------------------------------- kernels ---------------------------------- #

def stats_kernel(tm, n_pts, m_total, bf16_elem,
                 x_ref,
                 ew1, eg1, ebe1, ew2, eg2, ebe2,
                 dw1p, dw1g, dg1, dbe1, dw2,
                 s1, s2, s3, s4):
    phase = pl.program_id(0)
    t = pl.program_id(1)
    x = x_ref[...]                                        # (TM, C_in) f32
    inv_m = 1.0 / m_total
    cpt = tm // n_pts                                     # whole clouds per tile

    @pl.when(phase == 0)                                  # encoder BN1 stats
    def _():
        _accum_stats(s1, _l1_pre(x, ew1), t, tm)

    @pl.when(phase == 1)                                  # encoder BN2 stats
    def _():
        h1 = _bn_relu(_l1_pre(x, ew1), s1, eg1, ebe1, inv_m, bf16_elem)
        _accum_stats(s2, _mm(h1, ew2), t, tm)

    @pl.when(phase == 2)                                  # decoder BN1 stats
    def _():
        pf = _encoder_pf(x, ew1, eg1, ebe1, ew2, eg2, ebe2, s1, s2, inv_m, bf16_elem)
        _accum_stats(s3, _d1_pre(pf, dw1p, dw1g, n_pts, cpt), t, tm)

    @pl.when(phase == 3)                                  # decoder BN2 stats
    def _():
        pf = _encoder_pf(x, ew1, eg1, ebe1, ew2, eg2, ebe2, s1, s2, inv_m, bf16_elem)
        d1 = _bn_relu(_d1_pre(pf, dw1p, dw1g, n_pts, cpt), s3, dg1, dbe1,
                      inv_m, bf16_elem)
        _accum_stats(s4, _mm(d1, dw2), t, tm)


def decode_kernel(tm, n_pts, m_total, bf16_elem,
                  x_ref,
                  ew1, eg1, ebe1, ew2, eg2, ebe2,
                  dw1p, dw1g, dg1, dbe1, dw2, dg2, dbe2, wf, bfin,
                  s1, s2, s3, s4,
                  out_ref):
    x = x_ref[...]
    inv_m = 1.0 / m_total
    cpt = tm // n_pts
    pf = _encoder_pf(x, ew1, eg1, ebe1, ew2, eg2, ebe2, s1, s2, inv_m, bf16_elem)
    d1 = _bn_relu(_d1_pre(pf, dw1p, dw1g, n_pts, cpt), s3, dg1, dbe1,
                  inv_m, bf16_elem)
    d2 = _bn_relu(_mm(d1, dw2), s4, dg2, dbe2, inv_m, bf16_elem)
    out_ref[...] = (_mm(d2, wf) + bfin[...]).astype(out_ref.dtype)  # lane-dense store


# ------------------------------ host wrapper ------------------------------- #

def _use_bf16_elementwise():
    # packed-bf16 VPU exists on v6e / v7x; keep f32 elementwise on v5e / v4.
    try:
        kind = jax.devices()[0].device_kind.lower()
    except Exception:
        return False
    return ("v6" in kind) or ("v7" in kind)


def pointnet_forward(x, params, num_classes, tile_rows=None):
    B, N, C = x.shape
    M = B * N
    assert N % 8 == 0, "N must be a multiple of 8 (f32 sublane tiling)"

    if tile_rows is None:
        # One cloud per tile at these toy sizes.
        # TODO(synk): at realistic sizes pick the largest multiple of N whose
        #   double-buffered x/out tiles + resident weights + one tile's f32
        #   activation chain fit the per-chip VMEM budget (64 MiB on v7x).
        tile_rows = N
    assert tile_rows % N == 0 and M % tile_rows == 0
    n_tiles = M // tile_rows
    bf16_elem = _use_bf16_elementwise()

    (ew1, eb1, eg1, ebe1,
     ew2, eb2, eg2, ebe2,
     dw1, db1, dg1, dbe1,
     dw2, db2, dg2, dbe2,
     wf, bfin) = params
    del eb1, eb2, db1, db2        # pre-BN biases are exactly cancelled by BN

    cf = ew2.shape[1]
    dw1p, dw1g = dw1[:cf, :], dw1[cf:, :]          # split decoder Lin1 host-side

    # Lane-pad the classifier so the final store is lane-dense (unmasked vst).
    n_pad = max(LANE, -(-num_classes // LANE) * LANE)
    wf_pad = jnp.zeros((wf.shape[0], n_pad), jnp.float32).at[:, :num_classes].set(wf)
    bf_pad = jnp.zeros((1, n_pad), jnp.float32).at[:, :num_classes].set(bfin)

    bf16 = lambda w: w.astype(jnp.bfloat16)        # MXU-native weight dtype
    x2d = x.reshape(M, C)
    stat_cs = (eg1.shape[1], eg2.shape[1], dg1.shape[1], dg2.shape[1])

    # ---- pass 1: streaming BatchNorm statistics (4 phases over row tiles) ----
    stats_inputs = [x2d, ew1, eg1, ebe1, bf16(ew2), eg2, ebe2,
                    bf16(dw1p), bf16(dw1g), dg1, dbe1, bf16(dw2)]

    def resident2(shape):                          # DMA'd once, VMEM-resident
        return pl.BlockSpec(shape, lambda p, t: (0, 0))

    s1, s2, s3, s4 = pl.pallas_call(
        functools.partial(stats_kernel, tile_rows, N, M, bf16_elem),
        grid=(4, n_tiles),
        in_specs=[pl.BlockSpec((tile_rows, C), lambda p, t: (t, 0))]
                 + [resident2(a.shape) for a in stats_inputs[1:]],
        out_specs=tuple(resident2((2, c)) for c in stat_cs),
        out_shape=tuple(jax.ShapeDtypeStruct((2, c), jnp.float32) for c in stat_cs),
        compiler_params=pltpu.CompilerParams(
            dimension_semantics=("arbitrary", "arbitrary")),
    )(*stats_inputs)
    # TODO(synk): v7x megacore for this pass needs per-core stat partials + merge.

    # ---- pass 2: normalize + decode; tiles independent ("parallel" for v7x) ----
    dec_inputs = [x2d, ew1, eg1, ebe1, bf16(ew2), eg2, ebe2,
                  bf16(dw1p), bf16(dw1g), dg1, dbe1, bf16(dw2), dg2, dbe2,
                  bf16(wf_pad), bf_pad, s1, s2, s3, s4]

    def resident1(shape):
        return pl.BlockSpec(shape, lambda t: (0, 0))

    out = pl.pallas_call(
        functools.partial(decode_kernel, tile_rows, N, M, bf16_elem),
        grid=(n_tiles,),
        in_specs=[pl.BlockSpec((tile_rows, C), lambda t: (t, 0))]
                 + [resident1(a.shape) for a in dec_inputs[1:]],
        out_specs=pl.BlockSpec((tile_rows, n_pad), lambda t: (t, 0)),
        out_shape=jax.ShapeDtypeStruct((M, n_pad), jnp.float32),
        compiler_params=pltpu.CompilerParams(
            dimension_semantics=("parallel",)),
    )(*dec_inputs)

    return out[:, :num_classes].reshape(B, N, num_classes)


# ------------------------- deterministic parameters ------------------------ #

def _lin_init(key, cin, cout):
    k1, k2 = jax.random.split(key)
    bound = cin ** -0.5
    w = jax.random.uniform(k1, (cin, cout), jnp.float32, -bound, bound)
    b = jax.random.uniform(k2, (1, cout), jnp.float32, -bound, bound)
    return w, b


def _bn_init(key, c):
    k1, k2 = jax.random.split(key)
    gamma = 1.0 + 0.1 * jax.random.normal(k1, (1, c), jnp.float32)
    beta = 0.1 * jax.random.normal(k2, (1, c), jnp.float32)
    return gamma, beta


def init_params(key, cs_en, cs_dec, num_classes):
    params = []
    for i in range(1, len(cs_en)):
        key, k1, k2 = jax.random.split(key, 3)
        w, b = _lin_init(k1, cs_en[i - 1], cs_en[i])
        g, be = _bn_init(k2, cs_en[i])
        params += [w, b, g, be]
    for i in range(1, len(cs_dec)):
        key, k1, k2 = jax.random.split(key, 3)
        w, b = _lin_init(k1, cs_dec[i - 1], cs_dec[i])
        g, be = _bn_init(k2, cs_dec[i])
        params += [w, b, g, be]
    key, kf = jax.random.split(key)
    wf, bf = _lin_init(kf, cs_dec[-1], num_classes)
    params += [wf, bf]
    return params


# --------------------------- pure-JAX references --------------------------- #

def reference_forward(x, params, num_classes,
                      matmul_dtype=jnp.float32, bf16_elementwise=False):
    """PointNetModule.forward reference (training-mode BatchNorm).

    Default flags follow the PyTorch module in f32. With matmul_dtype=bf16 /
    bf16_elementwise it mirrors the kernel's dtype path while keeping the
    Linear biases and the concatenated joint features, so it also validates
    the kernel's bias-cancellation and split-matmul rewrites.
    """
    B, N, C = x.shape
    (ew1, eb1, eg1, ebe1, ew2, eb2, eg2, ebe2,
     dw1, db1, dg1, dbe1, dw2, db2, dg2, dbe2, wf, bfin) = params

    def mm(a, w):
        return jnp.dot(a.astype(matmul_dtype), w.astype(matmul_dtype),
                       preferred_element_type=jnp.float32)

    def bn_relu(h, g, be):
        mean = jnp.mean(h, axis=0, keepdims=True)
        var = jnp.mean(jnp.square(h - mean), axis=0, keepdims=True)
        scale = g * jax.lax.rsqrt(var + BN_EPS)
        shift = be - mean * scale
        if bf16_elementwise:
            y = (h.astype(jnp.bfloat16) * scale.astype(jnp.bfloat16)
                 + shift.astype(jnp.bfloat16))
            return jnp.maximum(y, 0.0).astype(jnp.float32)
        return jnp.maximum(h * scale + shift, 0.0)

    h = x.reshape(B * N, C)
    h = bn_relu(jnp.dot(h, ew1, preferred_element_type=jnp.float32) + eb1,
                eg1, ebe1)                 # first layer stays f32 (VPU in kernel)
    pf = bn_relu(mm(h, ew2) + eb2, eg2, ebe2)
    pf3 = pf.reshape(B, N, -1)
    gf = jnp.broadcast_to(jnp.max(pf3, axis=1, keepdims=True), pf3.shape)
    jf = jnp.concatenate([pf3, gf], axis=2).reshape(B * N, -1)
    h = bn_relu(mm(jf, dw1) + db1, dg1, dbe1)
    h = bn_relu(mm(h, dw2) + db2, dg2, dbe2)
    out = mm(h, wf) + bfin
    return out.reshape(B, N, num_classes)


# ---------------------------------- main ----------------------------------- #

if __name__ == "__main__":
    cs_en = [3, 32, 64]            # encoder channel sizes
    cs_dec = [128, 64, 32]         # decoder channel sizes (128 = 2 * cs_en[-1])
    num_classes = 20
    B, N = 2, 16

    key = jax.random.PRNGKey(0)
    kx, kp = jax.random.split(key)
    x = jax.random.normal(kx, (B, N, cs_en[0]), jnp.float32)
    params = init_params(kp, cs_en, cs_dec, num_classes)

    out = jax.block_until_ready(pointnet_forward(x, params, num_classes))
    assert out.shape == (B, N, num_classes)

    # Implementation check: reference mirroring the kernel's dtype path
    # (bf16 MXU matmuls; bf16 or f32 elementwise depending on the chip).
    bf16_elem = _use_bf16_elementwise()
    ref_mirror = reference_forward(x, params, num_classes,
                                   matmul_dtype=jnp.bfloat16,
                                   bf16_elementwise=bf16_elem)
    assert jnp.allclose(out, ref_mirror, rtol=2e-2, atol=2e-2), \
        "mismatch vs dtype-mirrored reference"

    # Semantic check against the full-f32 PyTorch-equivalent reference.
    ref_f32 = reference_forward(x, params, num_classes)
    assert jnp.allclose(out, ref_f32, rtol=5e-2, atol=5e-2), \
        "mismatch vs f32 reference"

    print("KERNEL_OK")
</pallas_src>

<mosaic_0001>
module attributes {stable_mosaic.version = 11 : i64} {
  func.func @stats_kernel(%arg0: i32, %arg1: i32, %arg2: memref<16x3xf32, #tpu.memory_space<vmem>>, %arg3: memref<3x32xf32, #tpu.memory_space<vmem>>, %arg4: memref<1x32xf32, #tpu.memory_space<vmem>>, %arg5: memref<1x32xf32, #tpu.memory_space<vmem>>, %arg6: memref<32x64xbf16, #tpu.memory_space<vmem>>, %arg7: memref<1x64xf32, #tpu.memory_space<vmem>>, %arg8: memref<1x64xf32, #tpu.memory_space<vmem>>, %arg9: memref<64x64xbf16, #tpu.memory_space<vmem>>, %arg10: memref<64x64xbf16, #tpu.memory_space<vmem>>, %arg11: memref<1x64xf32, #tpu.memory_space<vmem>>, %arg12: memref<1x64xf32, #tpu.memory_space<vmem>>, %arg13: memref<64x32xbf16, #tpu.memory_space<vmem>>, %arg14: memref<2x32xf32, #tpu.memory_space<vmem>>, %arg15: memref<2x64xf32, #tpu.memory_space<vmem>>, %arg16: memref<2x64xf32, #tpu.memory_space<vmem>>, %arg17: memref<2x32xf32, #tpu.memory_space<vmem>>) attributes {dimension_semantics = [#tpu.dimension_semantics<arbitrary>, #tpu.dimension_semantics<arbitrary>], iteration_bounds = array<i64: 4, 2>, scalar_prefetch = 0 : i64, scratch_operands = 0 : i64, tpu.core_type = #tpu.core_type<tc>, window_params = [{transform_indices = @transform_0, window_bounds = array<i64: 16, 3>}, {pipeline_mode = #tpu.pipeline_mode<synchronous>, transform_indices = @transform_1, window_bounds = array<i64: 3, 32>}, {pipeline_mode = #tpu.pipeline_mode<synchronous>, transform_indices = @transform_2, window_bounds = array<i64: 1, 32>}, {pipeline_mode = #tpu.pipeline_mode<synchronous>, transform_indices = @transform_3, window_bounds = array<i64: 1, 32>}, {pipeline_mode = #tpu.pipeline_mode<synchronous>, transform_indices = @transform_4, window_bounds = array<i64: 32, 64>}, {pipeline_mode = #tpu.pipeline_mode<synchronous>, transform_indices = @transform_5, window_bounds = array<i64: 1, 64>}, {pipeline_mode = #tpu.pipeline_mode<synchronous>, transform_indices = @transform_6, window_bounds = array<i64: 1, 64>}, {pipeline_mode = #tpu.pipeline_mode<synchronous>, transform_indices = @transform_7, window_bounds = array<i64: 64, 64>}, {pipeline_mode = #tpu.pipeline_mode<synchronous>, transform_indices = @transform_8, window_bounds = array<i64: 64, 64>}, {pipeline_mode = #tpu.pipeline_mode<synchronous>, transform_indices = @transform_9, window_bounds = array<i64: 1, 64>}, {pipeline_mode = #tpu.pipeline_mode<synchronous>, transform_indices = @transform_10, window_bounds = array<i64: 1, 64>}, {pipeline_mode = #tpu.pipeline_mode<synchronous>, transform_indices = @transform_11, window_bounds = array<i64: 64, 32>}, {pipeline_mode = #tpu.pipeline_mode<synchronous>, transform_indices = @transform_12, window_bounds = array<i64: 2, 32>}, {pipeline_mode = #tpu.pipeline_mode<synchronous>, transform_indices = @transform_13, window_bounds = array<i64: 2, 64>}, {pipeline_mode = #tpu.pipeline_mode<synchronous>, transform_indices = @transform_14, window_bounds = array<i64: 2, 64>}, {pipeline_mode = #tpu.pipeline_mode<synchronous>, transform_indices = @transform_15, window_bounds = array<i64: 2, 32>}]} {
    %c0 = arith.constant 0 : index
    %c0_0 = arith.constant 0 : index
    %0 = vector.load %arg2[%c0, %c0_0] : memref<16x3xf32, #tpu.memory_space<vmem>>, vector<16x3xf32>
    %c0_i32 = arith.constant 0 : i32
    %1 = arith.cmpi eq, %arg0, %c0_i32 : i32
    %2 = arith.extui %1 : i1 to i32
    %c0_i32_1 = arith.constant 0 : i32
    %3 = arith.cmpi ne, %2, %c0_i32_1 : i32
    scf.if %3 {
      %c0_5 = arith.constant 0 : index
      %c0_6 = arith.constant 0 : index
      %13 = vector.load %arg3[%c0_5, %c0_6] : memref<3x32xf32, #tpu.memory_space<vmem>>, vector<3x32xf32>
      %14 = vector.extract_strided_slice %0 {offsets = [0, 0], sizes = [16, 1], strides = [1, 1]} : vector<16x3xf32> to vector<16x1xf32>
      %15 = vector.extract_strided_slice %13 {offsets = [0, 0], sizes = [1, 32], strides = [1, 1]} : vector<3x32xf32> to vector<1x32xf32>
      %16 = vector.broadcast %14 : vector<16x1xf32> to vector<16x32xf32>
      %17 = vector.broadcast %15 : vector<1x32xf32> to vector<16x32xf32>
      %18 = arith.mulf %16, %17 : vector<16x32xf32>
      %19 = vector.extract_strided_slice %0 {offsets = [0, 1], sizes = [16, 1], strides = [1, 1]} : vector<16x3xf32> to vector<16x1xf32>
      %20 = vector.extract_strided_slice %13 {offsets = [1, 0], sizes = [1, 32], strides = [1, 1]} : vector<3x32xf32> to vector<1x32xf32>
      %21 = vector.broadcast %19 : vector<16x1xf32> to vector<16x32xf32>
      %22 = vector.broadcast %20 : vector<1x32xf32> to vector<16x32xf32>
      %23 = arith.mulf %21, %22 : vector<16x32xf32>
      %24 = arith.addf %18, %23 : vector<16x32xf32>
      %25 = vector.extract_strided_slice %0 {offsets = [0, 2], sizes = [16, 1], strides = [1, 1]} : vector<16x3xf32> to vector<16x1xf32>
      %26 = vector.extract_strided_slice %13 {offsets = [2, 0], sizes = [1, 32], strides = [1, 1]} : vector<3x32xf32> to vector<1x32xf32>
      %27 = vector.broadcast %25 : vector<16x1xf32> to vector<16x32xf32>
      %28 = vector.broadcast %26 : vector<1x32xf32> to vector<16x32xf32>
      %29 = arith.mulf %27, %28 : vector<16x32xf32>
      %30 = arith.addf %24, %29 : vector<16x32xf32>
      %cst = arith.constant dense<0.000000e+00> : vector<32xf32>
      %31 = vector.multi_reduction <add>, %30, %cst [0] : vector<16x32xf32> to vector<32xf32>
      %32 = vector.shape_cast %31 : vector<32xf32> to vector<1x32xf32>
      %cst_7 = arith.constant 6.250000e-02 : f32
      %33 = vector.broadcast %cst_7 : f32 to vector<1x32xf32>
      %34 = arith.mulf %32, %33 : vector<1x32xf32>
      %35 = vector.broadcast %34 : vector<1x32xf32> to vector<16x32xf32>
      %36 = arith.subf %30, %35 : vector<16x32xf32>
      %37 = arith.mulf %36, %36 : vector<16x32xf32>
      %cst_8 = arith.constant dense<0.000000e+00> : vector<32xf32>
      %38 = vector.multi_reduction <add>, %37, %cst_8 [0] : vector<16x32xf32> to vector<32xf32>
      %39 = vector.shape_cast %38 : vector<32xf32> to vector<1x32xf32>
      %c0_i32_9 = arith.constant 0 : i32
      %40 = arith.cmpi eq, %arg1, %c0_i32_9 : i32
      %41 = arith.extui %40 : i1 to i32
      %c0_i32_10 = arith.constant 0 : i32
      %42 = arith.cmpi ne, %41, %c0_i32_10 : i32
      scf.if %42 {
        %c0_13 = arith.constant 0 : index
        %c0_14 = arith.constant 0 : index
        %46 = vector.load %arg14[%c0_13, %c0_14] : memref<2x32xf32, #tpu.memory_space<vmem>>, vector<1x32xf32>
        tpu.vector_store %arg14[%c0_13, %c0_14], %34 {strides = array<i32>} : memref<2x32xf32, #tpu.memory_space<vmem>>, vector<1x32xf32>,
        %c1 = arith.constant 1 : index
        %c0_15 = arith.constant 0 : index
        %47 = vector.load %arg14[%c1, %c0_15] : memref<2x32xf32, #tpu.memory_space<vmem>>, vector<1x32xf32>
        tpu.vector_store %arg14[%c1, %c0_15], %39 {strides = array<i32>} : memref<2x32xf32, #tpu.memory_space<vmem>>, vector<1x32xf32>,
      } else {
      }
      %c0_i32_11 = arith.constant 0 : i32
      %43 = arith.cmpi ne, %arg1, %c0_i32_11 : i32
      %44 = arith.extui %43 : i1 to i32
      %c0_i32_12 = arith.constant 0 : i32
      %45 = arith.cmpi ne, %44, %c0_i32_12 : i32
      scf.if %45 {
        %c16_i32 = arith.constant 16 : i32
        %46 = arith.muli %arg1, %c16_i32 : i32
        %47 = arith.sitofp %46 : i32 to f32
        %cst_13 = arith.constant 1.600000e+01 : f32
        %48 = arith.addf %47, %cst_13 : f32
        %cst_14 = arith.constant 1.600000e+01 : f32
        %49 = arith.divf %cst_14, %48 : f32
        %c0_15 = arith.constant 0 : index
        %c0_16 = arith.constant 0 : index
        %50 = vector.load %arg14[%c0_15, %c0_16] : memref<2x32xf32, #tpu.memory_space<vmem>>, vector<1x32xf32>
        %51 = arith.subf %34, %50 : vector<1x32xf32>
        %52 = vector.broadcast %49 : f32 to vector<1x32xf32>
        %53 = arith.mulf %51, %52 : vector<1x32xf32>
        %54 = arith.addf %50, %53 : vector<1x32xf32>
        %c0_17 = arith.constant 0 : index
        %c0_18 = arith.constant 0 : index
        %55 = vector.load %arg14[%c0_17, %c0_18] : memref<2x32xf32, #tpu.memory_space<vmem>>, vector<1x32xf32>
        tpu.vector_store %arg14[%c0_17, %c0_18], %54 {strides = array<i32>} : memref<2x32xf32, #tpu.memory_space<vmem>>, vector<1x32xf32>,
        %c1 = arith.constant 1 : index
        %c0_19 = arith.constant 0 : index
        %56 = vector.load %arg14[%c1, %c0_19] : memref<2x32xf32, #tpu.memory_space<vmem>>, vector<1x32xf32>
        %57 = arith.addf %56, %39 : vector<1x32xf32>
        %58 = arith.mulf %51, %51 : vector<1x32xf32>
        %59 = arith.mulf %47, %49 : f32
        %60 = vector.broadcast %59 : f32 to vector<1x32xf32>
        %61 = arith.mulf %58, %60 : vector<1x32xf32>
        %62 = arith.addf %57, %61 : vector<1x32xf32>
        %c1_20 = arith.constant 1 : index
        %c0_21 = arith.constant 0 : index
        %63 = vector.load %arg14[%c1_20, %c0_21] : memref<2x32xf32, #tpu.memory_space<vmem>>, vector<1x32xf32>
        tpu.vector_store %arg14[%c1_20, %c0_21], %62 {strides = array<i32>} : memref<2x32xf32, #tpu.memory_space<vmem>>, vector<1x32xf32>,
      } else {
      }
    } else {
    }
    %c1_i32 = arith.constant 1 : i32
    %4 = arith.cmpi eq, %arg0, %c1_i32 : i32
    %5 = arith.extui %4 : i1 to i32
    %c0_i32_2 = arith.constant 0 : i32
    %6 = arith.cmpi ne, %5, %c0_i32_2 : i32
    scf.if %6 {
      %c0_5 = arith.constant 0 : index
      %c0_6 = arith.constant 0 : index
      %13 = vector.load %arg3[%c0_5, %c0_6] : memref<3x32xf32, #tpu.memory_space<vmem>>, vector<3x32xf32>
      %14 = vector.extract_strided_slice %0 {offsets = [0, 0], sizes = [16, 1], strides = [1, 1]} : vector<16x3xf32> to vector<16x1xf32>
      %15 = vector.extract_strided_slice %13 {offsets = [0, 0], sizes = [1, 32], strides = [1, 1]} : vector<3x32xf32> to vector<1x32xf32>
      %16 = vector.broadcast %14 : vector<16x1xf32> to vector<16x32xf32>
      %17 = vector.broadcast %15 : vector<1x32xf32> to vector<16x32xf32>
      %18 = arith.mulf %16, %17 : vector<16x32xf32>
      %19 = vector.extract_strided_slice %0 {offsets = [0, 1], sizes = [16, 1], strides = [1, 1]} : vector<16x3xf32> to vector<16x1xf32>
      %20 = vector.extract_strided_slice %13 {offsets = [1, 0], sizes = [1, 32], strides = [1, 1]} : vector<3x32xf32> to vector<1x32xf32>
      %21 = vector.broadcast %19 : vector<16x1xf32> to vector<16x32xf32>
      %22 = vector.broadcast %20 : vector<1x32xf32> to vector<16x32xf32>
      %23 = arith.mulf %21, %22 : vector<16x32xf32>
      %24 = arith.addf %18, %23 : vector<16x32xf32>
      %25 = vector.extract_strided_slice %0 {offsets = [0, 2], sizes = [16, 1], strides = [1, 1]} : vector<16x3xf32> to vector<16x1xf32>
      %26 = vector.extract_strided_slice %13 {offsets = [2, 0], sizes = [1, 32], strides = [1, 1]} : vector<3x32xf32> to vector<1x32xf32>
      %27 = vector.broadcast %25 : vector<16x1xf32> to vector<16x32xf32>
      %28 = vector.broadcast %26 : vector<1x32xf32> to vector<16x32xf32>
      %29 = arith.mulf %27, %28 : vector<16x32xf32>
      %30 = arith.addf %24, %29 : vector<16x32xf32>
      %c0_7 = arith.constant 0 : index
      %c0_8 = arith.constant 0 : index
      %31 = vector.load %arg14[%c0_7, %c0_8] : memref<2x32xf32, #tpu.memory_space<vmem>>, vector<1x32xf32>
      %c1 = arith.constant 1 : index
      %c0_9 = arith.constant 0 : index
      %32 = vector.load %arg14[%c1, %c0_9] : memref<2x32xf32, #tpu.memory_space<vmem>>, vector<1x32xf32>
      %cst = arith.constant 3.125000e-02 : f32
      %33 = vector.broadcast %cst : f32 to vector<1x32xf32>
      %34 = arith.mulf %32, %33 : vector<1x32xf32>
      %c0_10 = arith.constant 0 : index
      %c0_11 = arith.constant 0 : index
      %35 = vector.load %arg4[%c0_10, %c0_11] : memref<1x32xf32, #tpu.memory_space<vmem>>, vector<1x32xf32>
      %cst_12 = arith.constant 9.99999974E-6 : f32
      %36 = vector.broadcast %cst_12 : f32 to vector<1x32xf32>
      %37 = arith.addf %34, %36 : vector<1x32xf32>
      %38 = math.rsqrt %37 : vector<1x32xf32>
      %39 = arith.mulf %35, %38 : vector<1x32xf32>
      %c0_13 = arith.constant 0 : index
      %c0_14 = arith.constant 0 : index
      %40 = vector.load %arg5[%c0_13, %c0_14] : memref<1x32xf32, #tpu.memory_space<vmem>>, vector<1x32xf32>
      %41 = arith.mulf %31, %39 : vector<1x32xf32>
      %42 = arith.subf %40, %41 : vector<1x32xf32>
      %43 = vector.broadcast %39 : vector<1x32xf32> to vector<16x32xf32>
      %44 = arith.mulf %30, %43 : vector<16x32xf32>
      %45 = vector.broadcast %42 : vector<1x32xf32> to vector<16x32xf32>
      %46 = arith.addf %44, %45 : vector<16x32xf32>
      %cst_15 = arith.constant 0.000000e+00 : f32
      %47 = vector.broadcast %cst_15 : f32 to vector<16x32xf32>
      %48 = arith.maximumf %46, %47 : vector<16x32xf32>
      %49 = arith.truncf %48 : vector<16x32xf32> to vector<16x32xbf16>
      %c0_16 = arith.constant 0 : index
      %c0_17 = arith.constant 0 : index
      %50 = vector.load %arg6[%c0_16, %c0_17] : memref<32x64xbf16, #tpu.memory_space<vmem>>, vector<32x64xbf16>
      %cst_18 = arith.constant dense<0.000000e+00> : vector<16x64xf32>
      %51 = tpu.matmul %49, %50, %cst_18 {dimension_numbers = #tpu.dot_dimension_numbers<[1], [0], [0], [1], [0, 0, 1, 1], [], []>} : vector<16x32xbf16>, vector<32x64xbf16>, vector<16x64xf32> -> vector<16x64xf32>
      %cst_19 = arith.constant dense<0.000000e+00> : vector<64xf32>
      %52 = vector.multi_reduction <add>, %51, %cst_19 [0] : vector<16x64xf32> to vector<64xf32>
      %53 = vector.shape_cast %52 : vector<64xf32> to vector<1x64xf32>
      %cst_20 = arith.constant 6.250000e-02 : f32
      %54 = vector.broadcast %cst_20 : f32 to vector<1x64xf32>
      %55 = arith.mulf %53, %54 : vector<1x64xf32>
      %56 = vector.broadcast %55 : vector<1x64xf32> to vector<16x64xf32>
      %57 = arith.subf %51, %56 : vector<16x64xf32>
      %58 = arith.mulf %57, %57 : vector<16x64xf32>
      %cst_21 = arith.constant dense<0.000000e+00> : vector<64xf32>
      %59 = vector.multi_reduction <add>, %58, %cst_21 [0] : vector<16x64xf32> to vector<64xf32>
      %60 = vector.shape_cast %59 : vector<64xf32> to vector<1x64xf32>
      %c0_i32_22 = arith.constant 0 : i32
      %61 = arith.cmpi eq, %arg1, %c0_i32_22 : i32
      %62 = arith.extui %61 : i1 to i32
      %c0_i32_23 = arith.constant 0 : i32
      %63 = arith.cmpi ne, %62, %c0_i32_23 : i32
      scf.if %63 {
        %c0_26 = arith.constant 0 : index
        %c0_27 = arith.constant 0 : index
        %67 = vector.load %arg15[%c0_26, %c0_27] : memref<2x64xf32, #tpu.memory_space<vmem>>, vector<1x64xf32>
        tpu.vector_store %arg15[%c0_26, %c0_27], %55 {strides = array<i32>} : memref<2x64xf32, #tpu.memory_space<vmem>>, vector<1x64xf32>,
        %c1_28 = arith.constant 1 : index
        %c0_29 = arith.constant 0 : index
        %68 = vector.load %arg15[%c1_28, %c0_29] : memref<2x64xf32, #tpu.memory_space<vmem>>, vector<1x64xf32>
        tpu.vector_store %arg15[%c1_28, %c0_29], %60 {strides = array<i32>} : memref<2x64xf32, #tpu.memory_space<vmem>>, vector<1x64xf32>,
      } else {
      }
      %c0_i32_24 = arith.constant 0 : i32
      %64 = arith.cmpi ne, %arg1, %c0_i32_24 : i32
      %65 = arith.extui %64 : i1 to i32
      %c0_i32_25 = arith.constant 0 : i32
      %66 = arith.cmpi ne, %65, %c0_i32_25 : i32
      scf.if %66 {
        %c16_i32 = arith.constant 16 : i32
        %67 = arith.muli %arg1, %c16_i32 : i32
        %68 = arith.sitofp %67 : i32 to f32
        %cst_26 = arith.constant 1.600000e+01 : f32
        %69 = arith.addf %68, %cst_26 : f32
        %cst_27 = arith.constant 1.600000e+01 : f32
        %70 = arith.divf %cst_27, %69 : f32
        %c0_28 = arith.constant 0 : index
        %c0_29 = arith.constant 0 : index
        %71 = vector.load %arg15[%c0_28, %c0_29] : memref<2x64xf32, #tpu.memory_space<vmem>>, vector<1x64xf32>
        %72 = arith.subf %55, %71 : vector<1x64xf32>
        %73 = vector.broadcast %70 : f32 to vector<1x64xf32>
        %74 = arith.mulf %72, %73 : vector<1x64xf32>
        %75 = arith.addf %71, %74 : vector<1x64xf32>
        %c0_30 = arith.constant 0 : index
        %c0_31 = arith.constant 0 : index
        %76 = vector.load %arg15[%c0_30, %c0_31] : memref<2x64xf32, #tpu.memory_space<vmem>>, vector<1x64xf32>
        tpu.vector_store %arg15[%c0_30, %c0_31], %75 {strides = array<i32>} : memref<2x64xf32, #tpu.memory_space<vmem>>, vector<1x64xf32>,
        %c1_32 = arith.constant 1 : index
        %c0_33 = arith.constant 0 : index
        %77 = vector.load %arg15[%c1_32, %c0_33] : memref<2x64xf32, #tpu.memory_space<vmem>>, vector<1x64xf32>
        %78 = arith.addf %77, %60 : vector<1x64xf32>
        %79 = arith.mulf %72, %72 : vector<1x64xf32>
        %80 = arith.mulf %68, %70 : f32
        %81 = vector.broadcast %80 : f32 to vector<1x64xf32>
        %82 = arith.mulf %79, %81 : vector<1x64xf32>
        %83 = arith.addf %78, %82 : vector<1x64xf32>
        %c1_34 = arith.constant 1 : index
        %c0_35 = arith.constant 0 : index
        %84 = vector.load %arg15[%c1_34, %c0_35] : memref<2x64xf32, #tpu.memory_space<vmem>>, vector<1x64xf32>
        tpu.vector_store %arg15[%c1_34, %c0_35], %83 {strides = array<i32>} : memref<2x64xf32, #tpu.memory_space<vmem>>, vector<1x64xf32>,
      } else {
      }
    } else {
    }
    %c2_i32 = arith.constant 2 : i32
    %7 = arith.cmpi eq, %arg0, %c2_i32 : i32
    %8 = arith.extui %7 : i1 to i32
    %c0_i32_3 = arith.constant 0 : i32
    %9 = arith.cmpi ne, %8, %c0_i32_3 : i32
    scf.if %9 {
      %c0_5 = arith.constant 0 : index
      %c0_6 = arith.constant 0 : index
      %13 = vector.load %arg3[%c0_5, %c0_6] : memref<3x32xf32, #tpu.memory_space<vmem>>, vector<3x32xf32>
      %14 = vector.extract_strided_slice %0 {offsets = [0, 0], sizes = [16, 1], strides = [1, 1]} : vector<16x3xf32> to vector<16x1xf32>
      %15 = vector.extract_strided_slice %13 {offsets = [0, 0], sizes = [1, 32], strides = [1, 1]} : vector<3x32xf32> to vector<1x32xf32>
      %16 = vector.broadcast %14 : vector<16x1xf32> to vector<16x32xf32>
      %17 = vector.broadcast %15 : vector<1x32xf32> to vector<16x32xf32>
      %18 = arith.mulf %16, %17 : vector<16x32xf32>
      %19 = vector.extract_strided_slice %0 {offsets = [0, 1], sizes = [16, 1], strides = [1, 1]} : vector<16x3xf32> to vector<16x1xf32>
      %20 = vector.extract_strided_slice %13 {offsets = [1, 0], sizes = [1, 32], strides = [1, 1]} : vector<3x32xf32> to vector<1x32xf32>
      %21 = vector.broadcast %19 : vector<16x1xf32> to vector<16x32xf32>
      %22 = vector.broadcast %20 : vector<1x32xf32> to vector<16x32xf32>
      %23 = arith.mulf %21, %22 : vector<16x32xf32>
      %24 = arith.addf %18, %23 : vector<16x32xf32>
      %25 = vector.extract_strided_slice %0 {offsets = [0, 2], sizes = [16, 1], strides = [1, 1]} : vector<16x3xf32> to vector<16x1xf32>
      %26 = vector.extract_strided_slice %13 {offsets = [2, 0], sizes = [1, 32], strides = [1, 1]} : vector<3x32xf32> to vector<1x32xf32>
      %27 = vector.broadcast %25 : vector<16x1xf32> to vector<16x32xf32>
      %28 = vector.broadcast %26 : vector<1x32xf32> to vector<16x32xf32>
      %29 = arith.mulf %27, %28 : vector<16x32xf32>
      %30 = arith.addf %24, %29 : vector<16x32xf32>
      %c0_7 = arith.constant 0 : index
      %c0_8 = arith.constant 0 : index
      %31 = vector.load %arg14[%c0_7, %c0_8] : memref<2x32xf32, #tpu.memory_space<vmem>>, vector<1x32xf32>
      %c1 = arith.constant 1 : index
      %c0_9 = arith.constant 0 : index
      %32 = vector.load %arg14[%c1, %c0_9] : memref<2x32xf32, #tpu.memory_space<vmem>>, vector<1x32xf32>
      %cst = arith.constant 3.125000e-02 : f32
      %33 = vector.broadcast %cst : f32 to vector<1x32xf32>
      %34 = arith.mulf %32, %33 : vector<1x32xf32>
      %c0_10 = arith.constant 0 : index
      %c0_11 = arith.constant 0 : index
      %35 = vector.load %arg4[%c0_10, %c0_11] : memref<1x32xf32, #tpu.memory_space<vmem>>, vector<1x32xf32>
      %cst_12 = arith.constant 9.99999974E-6 : f32
      %36 = vector.broadcast %cst_12 : f32 to vector<1x32xf32>
      %37 = arith.addf %34, %36 : vector<1x32xf32>
      %38 = math.rsqrt %37 : vector<1x32xf32>
      %39 = arith.mulf %35, %38 : vector<1x32xf32>
      %c0_13 = arith.constant 0 : index
      %c0_14 = arith.constant 0 : index
      %40 = vector.load %arg5[%c0_13, %c0_14] : memref<1x32xf32, #tpu.memory_space<vmem>>, vector<1x32xf32>
      %41 = arith.mulf %31, %39 : vector<1x32xf32>
      %42 = arith.subf %40, %41 : vector<1x32xf32>
      %43 = vector.broadcast %39 : vector<1x32xf32> to vector<16x32xf32>
      %44 = arith.mulf %30, %43 : vector<16x32xf32>
      %45 = vector.broadcast %42 : vector<1x32xf32> to vector<16x32xf32>
      %46 = arith.addf %44, %45 : vector<16x32xf32>
      %cst_15 = arith.constant 0.000000e+00 : f32
      %47 = vector.broadcast %cst_15 : f32 to vector<16x32xf32>
      %48 = arith.maximumf %46, %47 : vector<16x32xf32>
      %49 = arith.truncf %48 : vector<16x32xf32> to vector<16x32xbf16>
      %c0_16 = arith.constant 0 : index
      %c0_17 = arith.constant 0 : index
      %50 = vector.load %arg6[%c0_16, %c0_17] : memref<32x64xbf16, #tpu.memory_space<vmem>>, vector<32x64xbf16>
      %cst_18 = arith.constant dense<0.000000e+00> : vector<16x64xf32>
      %51 = tpu.matmul %49, %50, %cst_18 {dimension_numbers = #tpu.dot_dimension_numbers<[1], [0], [0], [1], [0, 0, 1, 1], [], []>} : vector<16x32xbf16>, vector<32x64xbf16>, vector<16x64xf32> -> vector<16x64xf32>
      %c0_19 = arith.constant 0 : index
      %c0_20 = arith.constant 0 : index
      %52 = vector.load %arg15[%c0_19, %c0_20] : memref<2x64xf32, #tpu.memory_space<vmem>>, vector<1x64xf32>
      %c1_21 = arith.constant 1 : index
      %c0_22 = arith.constant 0 : index
      %53 = vector.load %arg15[%c1_21, %c0_22] : memref<2x64xf32, #tpu.memory_space<vmem>>, vector<1x64xf32>
      %cst_23 = arith.constant 3.125000e-02 : f32
      %54 = vector.broadcast %cst_23 : f32 to vector<1x64xf32>
      %55 = arith.mulf %53, %54 : vector<1x64xf32>
      %c0_24 = arith.constant 0 : index
      %c0_25 = arith.constant 0 : index
      %56 = vector.load %arg7[%c0_24, %c0_25] : memref<1x64xf32, #tpu.memory_space<vmem>>, vector<1x64xf32>
      %cst_26 = arith.constant 9.99999974E-6 : f32
      %57 = vector.broadcast %cst_26 : f32 to vector<1x64xf32>
      %58 = arith.addf %55, %57 : vector<1x64xf32>
      %59 = math.rsqrt %58 : vector<1x64xf32>
      %60 = arith.mulf %56, %59 : vector<1x64xf32>
      %c0_27 = arith.constant 0 : index
      %c0_28 = arith.constant 0 : index
      %61 = vector.load %arg8[%c0_27, %c0_28] : memref<1x64xf32, #tpu.memory_space<vmem>>, vector<1x64xf32>
      %62 = arith.mulf %52, %60 : vector<1x64xf32>
      %63 = arith.subf %61, %62 : vector<1x64xf32>
      %64 = vector.broadcast %60 : vector<1x64xf32> to vector<16x64xf32>
      %65 = arith.mulf %51, %64 : vector<16x64xf32>
      %66 = vector.broadcast %63 : vector<1x64xf32> to vector<16x64xf32>
      %67 = arith.addf %65, %66 : vector<16x64xf32>
      %cst_29 = arith.constant 0.000000e+00 : f32
      %68 = vector.broadcast %cst_29 : f32 to vector<16x64xf32>
      %69 = arith.maximumf %67, %68 : vector<16x64xf32>
      %70 = vector.shape_cast %69 : vector<16x64xf32> to vector<1x16x64xf32>
      %cst_30 = arith.constant dense<0xFF800000> : vector<1x64xf32>
      %71 = vector.multi_reduction <maximumf>, %70, %cst_30 [1] : vector<1x16x64xf32> to vector<1x64xf32>
      %72 = arith.truncf %69 : vector<16x64xf32> to vector<16x64xbf16>
      %c0_31 = arith.constant 0 : index
      %c0_32 = arith.constant 0 : index
      %73 = vector.load %arg9[%c0_31, %c0_32] : memref<64x64xbf16, #tpu.memory_space<vmem>>, vector<64x64xbf16>
      %cst_33 = arith.constant dense<0.000000e+00> : vector<16x64xf32>
      %74 = tpu.matmul %72, %73, %cst_33 {dimension_numbers = #tpu.dot_dimension_numbers<[1], [0], [0], [1], [0, 0, 1, 1], [], []>} : vector<16x64xbf16>, vector<64x64xbf16>, vector<16x64xf32> -> vector<16x64xf32>
      %75 = arith.truncf %71 : vector<1x64xf32> to vector<1x64xbf16>
      %c0_34 = arith.constant 0 : index
      %c0_35 = arith.constant 0 : index
      %76 = vector.load %arg10[%c0_34, %c0_35] : memref<64x64xbf16, #tpu.memory_space<vmem>>, vector<64x64xbf16>
      %cst_36 = arith.constant dense<0.000000e+00> : vector<1x64xf32>
      %77 = tpu.matmul %75, %76, %cst_36 {dimension_numbers = #tpu.dot_dimension_numbers<[1], [0], [0], [1], [0, 0, 1, 1], [], []>} : vector<1x64xbf16>, vector<64x64xbf16>, vector<1x64xf32> -> vector<1x64xf32>
      %78 = vector.shape_cast %74 : vector<16x64xf32> to vector<1x16x64xf32>
      %79 = vector.shape_cast %77 : vector<1x64xf32> to vector<1x1x64xf32>
      %80 = vector.broadcast %79 : vector<1x1x64xf32> to vector<1x16x64xf32>
      %81 = arith.addf %78, %80 : vector<1x16x64xf32>
      %82 = vector.shape_cast %81 : vector<1x16x64xf32> to vector<16x64xf32>
      %cst_37 = arith.constant dense<0.000000e+00> : vector<64xf32>
      %83 = vector.multi_reduction <add>, %82, %cst_37 [0] : vector<16x64xf32> to vector<64xf32>
      %84 = vector.shape_cast %83 : vector<64xf32> to vector<1x64xf32>
      %cst_38 = arith.constant 6.250000e-02 : f32
      %85 = vector.broadcast %cst_38 : f32 to vector<1x64xf32>
      %86 = arith.mulf %84, %85 : vector<1x64xf32>
      %87 = vector.broadcast %86 : vector<1x64xf32> to vector<16x64xf32>
      %88 = arith.subf %82, %87 : vector<16x64xf32>
      %89 = arith.mulf %88, %88 : vector<16x64xf32>
      %cst_39 = arith.constant dense<0.000000e+00> : vector<64xf32>
      %90 = vector.multi_reduction <add>, %89, %cst_39 [0] : vector<16x64xf32> to vector<64xf32>
      %91 = vector.shape_cast %90 : vector<64xf32> to vector<1x64xf32>
      %c0_i32_40 = arith.constant 0 : i32
      %92 = arith.cmpi eq, %arg1, %c0_i32_40 : i32
      %93 = arith.extui %92 : i1 to i32
      %c0_i32_41 = arith.constant 0 : i32
      %94 = arith.cmpi ne, %93, %c0_i32_41 : i32
      scf.if %94 {
        %c0_44 = arith.constant 0 : index
        %c0_45 = arith.constant 0 : index
        %98 = vector.load %arg16[%c0_44, %c0_45] : memref<2x64xf32, #tpu.memory_space<vmem>>, vector<1x64xf32>
        tpu.vector_store %arg16[%c0_44, %c0_45], %86 {strides = array<i32>} : memref<2x64xf32, #tpu.memory_space<vmem>>, vector<1x64xf32>,
        %c1_46 = arith.constant 1 : index
        %c0_47 = arith.constant 0 : index
        %99 = vector.load %arg16[%c1_46, %c0_47] : memref<2x64xf32, #tpu.memory_space<vmem>>, vector<1x64xf32>
        tpu.vector_store %arg16[%c1_46, %c0_47], %91 {strides = array<i32>} : memref<2x64xf32, #tpu.memory_space<vmem>>, vector<1x64xf32>,
      } else {
      }
      %c0_i32_42 = arith.constant 0 : i32
      %95 = arith.cmpi ne, %arg1, %c0_i32_42 : i32
      %96 = arith.extui %95 : i1 to i32
      %c0_i32_43 = arith.constant 0 : i32
      %97 = arith.cmpi ne, %96, %c0_i32_43 : i32
      scf.if %97 {
        %c16_i32 = arith.constant 16 : i32
        %98 = arith.muli %arg1, %c16_i32 : i32
        %99 = arith.sitofp %98 : i32 to f32
        %cst_44 = arith.constant 1.600000e+01 : f32
        %100 = arith.addf %99, %cst_44 : f32
        %cst_45 = arith.constant 1.600000e+01 : f32
        %101 = arith.divf %cst_45, %100 : f32
        %c0_46 = arith.constant 0 : index
        %c0_47 = arith.constant 0 : index
        %102 = vector.load %arg16[%c0_46, %c0_47] : memref<2x64xf32, #tpu.memory_space<vmem>>, vector<1x64xf32>
        %103 = arith.subf %86, %102 : vector<1x64xf32>
        %104 = vector.broadcast %101 : f32 to vector<1x64xf32>
        %105 = arith.mulf %103, %104 : vector<1x64xf32>
        %106 = arith.addf %102, %105 : vector<1x64xf32>
        %c0_48 = arith.constant 0 : index
        %c0_49 = arith.constant 0 : index
        %107 = vector.load %arg16[%c0_48, %c0_49] : memref<2x64xf32, #tpu.memory_space<vmem>>, vector<1x64xf32>
        tpu.vector_store %arg16[%c0_48, %c0_49], %106 {strides = array<i32>} : memref<2x64xf32, #tpu.memory_space<vmem>>, vector<1x64xf32>,
        %c1_50 = arith.constant 1 : index
        %c0_51 = arith.constant 0 : index
        %108 = vector.load %arg16[%c1_50, %c0_51] : memref<2x64xf32, #tpu.memory_space<vmem>>, vector<1x64xf32>
        %109 = arith.addf %108, %91 : vector<1x64xf32>
        %110 = arith.mulf %103, %103 : vector<1x64xf32>
        %111 = arith.mulf %99, %101 : f32
        %112 = vector.broadcast %111 : f32 to vector<1x64xf32>
        %113 = arith.mulf %110, %112 : vector<1x64xf32>
        %114 = arith.addf %109, %113 : vector<1x64xf32>
        %c1_52 = arith.constant 1 : index
        %c0_53 = arith.constant 0 : index
        %115 = vector.load %arg16[%c1_52, %c0_53] : memref<2x64xf32, #tpu.memory_space<vmem>>, vector<1x64xf32>
        tpu.vector_store %arg16[%c1_52, %c0_53], %114 {strides = array<i32>} : memref<2x64xf32, #tpu.memory_space<vmem>>, vector<1x64xf32>,
      } else {
      }
    } else {
    }
    %c3_i32 = arith.constant 3 : i32
    %10 = arith.cmpi eq, %arg0, %c3_i32 : i32
    %11 = arith.extui %10 : i1 to i32
    %c0_i32_4 = arith.constant 0 : i32
    %12 = arith.cmpi ne, %11, %c0_i32_4 : i32
    scf.if %12 {
      %c0_5 = arith.constant 0 : index
      %c0_6 = arith.constant 0 : index
      %13 = vector.load %arg3[%c0_5, %c0_6] : memref<3x32xf32, #tpu.memory_space<vmem>>, vector<3x32xf32>
      %14 = vector.extract_strided_slice %0 {offsets = [0, 0], sizes = [16, 1], strides = [1, 1]} : vector<16x3xf32> to vector<16x1xf32>
      %15 = vector.extract_strided_slice %13 {offsets = [0, 0], sizes = [1, 32], strides = [1, 1]} : vector<3x32xf32> to vector<1x32xf32>
      %16 = vector.broadcast %14 : vector<16x1xf32> to vector<16x32xf32>
      %17 = vector.broadcast %15 : vector<1x32xf32> to vector<16x32xf32>
      %18 = arith.mulf %16, %17 : vector<16x32xf32>
      %19 = vector.extract_strided_slice %0 {offsets = [0, 1], sizes = [16, 1], strides = [1, 1]} : vector<16x3xf32> to vector<16x1xf32>
      %20 = vector.extract_strided_slice %13 {offsets = [1, 0], sizes = [1, 32], strides = [1, 1]} : vector<3x32xf32> to vector<1x32xf32>
      %21 = vector.broadcast %19 : vector<16x1xf32> to vector<16x32xf32>
      %22 = vector.broadcast %20 : vector<1x32xf32> to vector<16x32xf32>
      %23 = arith.mulf %21, %22 : vector<16x32xf32>
      %24 = arith.addf %18, %23 : vector<16x32xf32>
      %25 = vector.extract_strided_slice %0 {offsets = [0, 2], sizes = [16, 1], strides = [1, 1]} : vector<16x3xf32> to vector<16x1xf32>
      %26 = vector.extract_strided_slice %13 {offsets = [2, 0], sizes = [1, 32], strides = [1, 1]} : vector<3x32xf32> to vector<1x32xf32>
      %27 = vector.broadcast %25 : vector<16x1xf32> to vector<16x32xf32>
      %28 = vector.broadcast %26 : vector<1x32xf32> to vector<16x32xf32>
      %29 = arith.mulf %27, %28 : vector<16x32xf32>
      %30 = arith.addf %24, %29 : vector<16x32xf32>
      %c0_7 = arith.constant 0 : index
      %c0_8 = arith.constant 0 : index
      %31 = vector.load %arg14[%c0_7, %c0_8] : memref<2x32xf32, #tpu.memory_space<vmem>>, vector<1x32xf32>
      %c1 = arith.constant 1 : index
      %c0_9 = arith.constant 0 : index
      %32 = vector.load %arg14[%c1, %c0_9] : memref<2x32xf32, #tpu.memory_space<vmem>>, vector<1x32xf32>
      %cst = arith.constant 3.125000e-02 : f32
      %33 = vector.broadcast %cst : f32 to vector<1x32xf32>
      %34 = arith.mulf %32, %33 : vector<1x32xf32>
      %c0_10 = arith.constant 0 : index
      %c0_11 = arith.constant 0 : index
      %35 = vector.load %arg4[%c0_10, %c0_11] : memref<1x32xf32, #tpu.memory_space<vmem>>, vector<1x32xf32>
      %cst_12 = arith.constant 9.99999974E-6 : f32
      %36 = vector.broadcast %cst_12 : f32 to vector<1x32xf32>
      %37 = arith.addf %34, %36 : vector<1x32xf32>
      %38 = math.rsqrt %37 : vector<1x32xf32>
      %39 = arith.mulf %35, %38 : vector<1x32xf32>
      %c0_13 = arith.constant 0 : index
      %c0_14 = arith.constant 0 : index
      %40 = vector.load %arg5[%c0_13, %c0_14] : memref<1x32xf32, #tpu.memory_space<vmem>>, vector<1x32xf32>
      %41 = arith.mulf %31, %39 : vector<1x32xf32>
      %42 = arith.subf %40, %41 : vector<1x32xf32>
      %43 = vector.broadcast %39 : vector<1x32xf32> to vector<16x32xf32>
      %44 = arith.mulf %30, %43 : vector<16x32xf32>
      %45 = vector.broadcast %42 : vector<1x32xf32> to vector<16x32xf32>
      %46 = arith.addf %44, %45 : vector<16x32xf32>
      %cst_15 = arith.constant 0.000000e+00 : f32
      %47 = vector.broadcast %cst_15 : f32 to vector<16x32xf32>
      %48 = arith.maximumf %46, %47 : vector<16x32xf32>
      %49 = arith.truncf %48 : vector<16x32xf32> to vector<16x32xbf16>
      %c0_16 = arith.constant 0 : index
      %c0_17 = arith.constant 0 : index
      %50 = vector.load %arg6[%c0_16, %c0_17] : memref<32x64xbf16, #tpu.memory_space<vmem>>, vector<32x64xbf16>
      %cst_18 = arith.constant dense<0.000000e+00> : vector<16x64xf32>
      %51 = tpu.matmul %49, %50, %cst_18 {dimension_numbers = #tpu.dot_dimension_numbers<[1], [0], [0], [1], [0, 0, 1, 1], [], []>} : vector<16x32xbf16>, vector<32x64xbf16>, vector<16x64xf32> -> vector<16x64xf32>
      %c0_19 = arith.constant 0 : index
      %c0_20 = arith.constant 0 : index
      %52 = vector.load %arg15[%c0_19, %c0_20] : memref<2x64xf32, #tpu.memory_space<vmem>>, vector<1x64xf32>
      %c1_21 = arith.constant 1 : index
      %c0_22 = arith.constant 0 : index
      %53 = vector.load %arg15[%c1_21, %c0_22] : memref<2x64xf32, #tpu.memory_space<vmem>>, vector<1x64xf32>
      %cst_23 = arith.constant 3.125000e-02 : f32
      %54 = vector.broadcast %cst_23 : f32 to vector<1x64xf32>
      %55 = arith.mulf %53, %54 : vector<1x64xf32>
      %c0_24 = arith.constant 0 : index
      %c0_25 = arith.constant 0 : index
      %56 = vector.load %arg7[%c0_24, %c0_25] : memref<1x64xf32, #tpu.memory_space<vmem>>, vector<1x64xf32>
      %cst_26 = arith.constant 9.99999974E-6 : f32
      %57 = vector.broadcast %cst_26 : f32 to vector<1x64xf32>
      %58 = arith.addf %55, %57 : vector<1x64xf32>
      %59 = math.rsqrt %58 : vector<1x64xf32>
      %60 = arith.mulf %56, %59 : vector<1x64xf32>
      %c0_27 = arith.constant 0 : index
      %c0_28 = arith.constant 0 : index
      %61 = vector.load %arg8[%c0_27, %c0_28] : memref<1x64xf32, #tpu.memory_space<vmem>>, vector<1x64xf32>
      %62 = arith.mulf %52, %60 : vector<1x64xf32>
      %63 = arith.subf %61, %62 : vector<1x64xf32>
      %64 = vector.broadcast %60 : vector<1x64xf32> to vector<16x64xf32>
      %65 = arith.mulf %51, %64 : vector<16x64xf32>
      %66 = vector.broadcast %63 : vector<1x64xf32> to vector<16x64xf32>
      %67 = arith.addf %65, %66 : vector<16x64xf32>
      %cst_29 = arith.constant 0.000000e+00 : f32
      %68 = vector.broadcast %cst_29 : f32 to vector<16x64xf32>
      %69 = arith.maximumf %67, %68 : vector<16x64xf32>
      %70 = vector.shape_cast %69 : vector<16x64xf32> to vector<1x16x64xf32>
      %cst_30 = arith.constant dense<0xFF800000> : vector<1x64xf32>
      %71 = vector.multi_reduction <maximumf>, %70, %cst_30 [1] : vector<1x16x64xf32> to vector<1x64xf32>
      %72 = arith.truncf %69 : vector<16x64xf32> to vector<16x64xbf16>
      %c0_31 = arith.constant 0 : index
      %c0_32 = arith.constant 0 : index
      %73 = vector.load %arg9[%c0_31, %c0_32] : memref<64x64xbf16, #tpu.memory_space<vmem>>, vector<64x64xbf16>
      %cst_33 = arith.constant dense<0.000000e+00> : vector<16x64xf32>
      %74 = tpu.matmul %72, %73, %cst_33 {dimension_numbers = #tpu.dot_dimension_numbers<[1], [0], [0], [1], [0, 0, 1, 1], [], []>} : vector<16x64xbf16>, vector<64x64xbf16>, vector<16x64xf32> -> vector<16x64xf32>
      %75 = arith.truncf %71 : vector<1x64xf32> to vector<1x64xbf16>
      %c0_34 = arith.constant 0 : index
      %c0_35 = arith.constant 0 : index
      %76 = vector.load %arg10[%c0_34, %c0_35] : memref<64x64xbf16, #tpu.memory_space<vmem>>, vector<64x64xbf16>
      %cst_36 = arith.constant dense<0.000000e+00> : vector<1x64xf32>
      %77 = tpu.matmul %75, %76, %cst_36 {dimension_numbers = #tpu.dot_dimension_numbers<[1], [0], [0], [1], [0, 0, 1, 1], [], []>} : vector<1x64xbf16>, vector<64x64xbf16>, vector<1x64xf32> -> vector<1x64xf32>
      %78 = vector.shape_cast %74 : vector<16x64xf32> to vector<1x16x64xf32>
      %79 = vector.shape_cast %77 : vector<1x64xf32> to vector<1x1x64xf32>
      %80 = vector.broadcast %79 : vector<1x1x64xf32> to vector<1x16x64xf32>
      %81 = arith.addf %78, %80 : vector<1x16x64xf32>
      %82 = vector.shape_cast %81 : vector<1x16x64xf32> to vector<16x64xf32>
      %c0_37 = arith.constant 0 : index
      %c0_38 = arith.constant 0 : index
      %83 = vector.load %arg16[%c0_37, %c0_38] : memref<2x64xf32, #tpu.memory_space<vmem>>, vector<1x64xf32>
      %c1_39 = arith.constant 1 : index
      %c0_40 = arith.constant 0 : index
      %84 = vector.load %arg16[%c1_39, %c0_40] : memref<2x64xf32, #tpu.memory_space<vmem>>, vector<1x64xf32>
      %cst_41 = arith.constant 3.125000e-02 : f32
      %85 = vector.broadcast %cst_41 : f32 to vector<1x64xf32>
      %86 = arith.mulf %84, %85 : vector<1x64xf32>
      %c0_42 = arith.constant 0 : index
      %c0_43 = arith.constant 0 : index
      %87 = vector.load %arg11[%c0_42, %c0_43] : memref<1x64xf32, #tpu.memory_space<vmem>>, vector<1x64xf32>
      %cst_44 = arith.constant 9.99999974E-6 : f32
      %88 = vector.broadcast %cst_44 : f32 to vector<1x64xf32>
      %89 = arith.addf %86, %88 : vector<1x64xf32>
      %90 = math.rsqrt %89 : vector<1x64xf32>
      %91 = arith.mulf %87, %90 : vector<1x64xf32>
      %c0_45 = arith.constant 0 : index
      %c0_46 = arith.constant 0 : index
      %92 = vector.load %arg12[%c0_45, %c0_46] : memref<1x64xf32, #tpu.memory_space<vmem>>, vector<1x64xf32>
      %93 = arith.mulf %83, %91 : vector<1x64xf32>
      %94 = arith.subf %92, %93 : vector<1x64xf32>
      %95 = vector.broadcast %91 : vector<1x64xf32> to vector<16x64xf32>
      %96 = arith.mulf %82, %95 : vector<16x64xf32>
      %97 = vector.broadcast %94 : vector<1x64xf32> to vector<16x64xf32>
      %98 = arith.addf %96, %97 : vector<16x64xf32>
      %cst_47 = arith.constant 0.000000e+00 : f32
      %99 = vector.broadcast %cst_47 : f32 to vector<16x64xf32>
      %100 = arith.maximumf %98, %99 : vector<16x64xf32>
      %101 = arith.truncf %100 : vector<16x64xf32> to vector<16x64xbf16>
      %c0_48 = arith.constant 0 : index
      %c0_49 = arith.constant 0 : index
      %102 = vector.load %arg13[%c0_48, %c0_49] : memref<64x32xbf16, #tpu.memory_space<vmem>>, vector<64x32xbf16>
      %cst_50 = arith.constant dense<0.000000e+00> : vector<16x32xf32>
      %103 = tpu.matmul %101, %102, %cst_50 {dimension_numbers = #tpu.dot_dimension_numbers<[1], [0], [0], [1], [0, 0, 1, 1], [], []>} : vector<16x64xbf16>, vector<64x32xbf16>, vector<16x32xf32> -> vector<16x32xf32>
      %cst_51 = arith.constant dense<0.000000e+00> : vector<32xf32>
      %104 = vector.multi_reduction <add>, %103, %cst_51 [0] : vector<16x32xf32> to vector<32xf32>
      %105 = vector.shape_cast %104 : vector<32xf32> to vector<1x32xf32>
      %cst_52 = arith.constant 6.250000e-02 : f32
      %106 = vector.broadcast %cst_52 : f32 to vector<1x32xf32>
      %107 = arith.mulf %105, %106 : vector<1x32xf32>
      %108 = vector.broadcast %107 : vector<1x32xf32> to vector<16x32xf32>
      %109 = arith.subf %103, %108 : vector<16x32xf32>
      %110 = arith.mulf %109, %109 : vector<16x32xf32>
      %cst_53 = arith.constant dense<0.000000e+00> : vector<32xf32>
      %111 = vector.multi_reduction <add>, %110, %cst_53 [0] : vector<16x32xf32> to vector<32xf32>
      %112 = vector.shape_cast %111 : vector<32xf32> to vector<1x32xf32>
      %c0_i32_54 = arith.constant 0 : i32
      %113 = arith.cmpi eq, %arg1, %c0_i32_54 : i32
      %114 = arith.extui %113 : i1 to i32
      %c0_i32_55 = arith.constant 0 : i32
      %115 = arith.cmpi ne, %114, %c0_i32_55 : i32
      scf.if %115 {
        %c0_58 = arith.constant 0 : index
        %c0_59 = arith.constant 0 : index
        %119 = vector.load %arg17[%c0_58, %c0_59] : memref<2x32xf32, #tpu.memory_space<vmem>>, vector<1x32xf32>
        tpu.vector_store %arg17[%c0_58, %c0_59], %107 {strides = array<i32>} : memref<2x32xf32, #tpu.memory_space<vmem>>, vector<1x32xf32>,
        %c1_60 = arith.constant 1 : index
        %c0_61 = arith.constant 0 : index
        %120 = vector.load %arg17[%c1_60, %c0_61] : memref<2x32xf32, #tpu.memory_space<vmem>>, vector<1x32xf32>
        tpu.vector_store %arg17[%c1_60, %c0_61], %112 {strides = array<i32>} : memref<2x32xf32, #tpu.memory_space<vmem>>, vector<1x32xf32>,
      } else {
      }
      %c0_i32_56 = arith.constant 0 : i32
      %116 = arith.cmpi ne, %arg1, %c0_i32_56 : i32
      %117 = arith.extui %116 : i1 to i32
      %c0_i32_57 = arith.constant 0 : i32
      %118 = arith.cmpi ne, %117, %c0_i32_57 : i32
      scf.if %118 {
        %c16_i32 = arith.constant 16 : i32
        %119 = arith.muli %arg1, %c16_i32 : i32
        %120 = arith.sitofp %119 : i32 to f32
        %cst_58 = arith.constant 1.600000e+01 : f32
        %121 = arith.addf %120, %cst_58 : f32
        %cst_59 = arith.constant 1.600000e+01 : f32
        %122 = arith.divf %cst_59, %121 : f32
        %c0_60 = arith.constant 0 : index
        %c0_61 = arith.constant 0 : index
        %123 = vector.load %arg17[%c0_60, %c0_61] : memref<2x32xf32, #tpu.memory_space<vmem>>, vector<1x32xf32>
        %124 = arith.subf %107, %123 : vector<1x32xf32>
        %125 = vector.broadcast %122 : f32 to vector<1x32xf32>
        %126 = arith.mulf %124, %125 : vector<1x32xf32>
        %127 = arith.addf %123, %126 : vector<1x32xf32>
        %c0_62 = arith.constant 0 : index
        %c0_63 = arith.constant 0 : index
        %128 = vector.load %arg17[%c0_62, %c0_63] : memref<2x32xf32, #tpu.memory_space<vmem>>, vector<1x32xf32>
        tpu.vector_store %arg17[%c0_62, %c0_63], %127 {strides = array<i32>} : memref<2x32xf32, #tpu.memory_space<vmem>>, vector<1x32xf32>,
        %c1_64 = arith.constant 1 : index
        %c0_65 = arith.constant 0 : index
        %129 = vector.load %arg17[%c1_64, %c0_65] : memref<2x32xf32, #tpu.memory_space<vmem>>, vector<1x32xf32>
        %130 = arith.addf %129, %112 : vector<1x32xf32>
        %131 = arith.mulf %124, %124 : vector<1x32xf32>
        %132 = arith.mulf %120, %122 : f32
        %133 = vector.broadcast %132 : f32 to vector<1x32xf32>
        %134 = arith.mulf %131, %133 : vector<1x32xf32>
        %135 = arith.addf %130, %134 : vector<1x32xf32>
        %c1_66 = arith.constant 1 : index
        %c0_67 = arith.constant 0 : index
        %136 = vector.load %arg17[%c1_66, %c0_67] : memref<2x32xf32, #tpu.memory_space<vmem>>, vector<1x32xf32>
        tpu.vector_store %arg17[%c1_66, %c0_67], %135 {strides = array<i32>} : memref<2x32xf32, #tpu.memory_space<vmem>>, vector<1x32xf32>,
      } else {
      }
    } else {
    }
    return
  }
  func.func @transform_0(%arg0: i32, %arg1: i32) -> (i32, i32) {
    %c0_i32 = arith.constant 0 : i32
    %c0_i32_0 = arith.constant 0 : i32
    return %arg1, %c0_i32 : i32, i32
  }
  func.func @transform_1(%arg0: i32, %arg1: i32) -> (i32, i32) {
    %c0_i32 = arith.constant 0 : i32
    %c0_i32_0 = arith.constant 0 : i32
    %c0_i32_1 = arith.constant 0 : i32
    return %c0_i32, %c0_i32_0 : i32, i32
  }
  func.func @transform_2(%arg0: i32, %arg1: i32) -> (i32, i32) {
    %c0_i32 = arith.constant 0 : i32
    %c0_i32_0 = arith.constant 0 : i32
    %c0_i32_1 = arith.constant 0 : i32
    return %c0_i32, %c0_i32_0 : i32, i32
  }
  func.func @transform_3(%arg0: i32, %arg1: i32) -> (i32, i32) {
    %c0_i32 = arith.constant 0 : i32
    %c0_i32_0 = arith.constant 0 : i32
    %c0_i32_1 = arith.constant 0 : i32
    return %c0_i32, %c0_i32_0 : i32, i32
  }
  func.func @transform_4(%arg0: i32, %arg1: i32) -> (i32, i32) {
    %c0_i32 = arith.constant 0 : i32
    %c0_i32_0 = arith.constant 0 : i32
    %c0_i32_1 = arith.constant 0 : i32
    return %c0_i32, %c0_i32_0 : i32, i32
  }
  func.func @transform_5(%arg0: i32, %arg1: i32) -> (i32, i32) {
    %c0_i32 = arith.constant 0 : i32
    %c0_i32_0 = arith.constant 0 : i32
    %c0_i32_1 = arith.constant 0 : i32
    return %c0_i32, %c0_i32_0 : i32, i32
  }
  func.func @transform_6(%arg0: i32, %arg1: i32) -> (i32, i32) {
    %c0_i32 = arith.constant 0 : i32
    %c0_i32_0 = arith.constant 0 : i32
    %c0_i32_1 = arith.constant 0 : i32
    return %c0_i32, %c0_i32_0 : i32, i32
  }
  func.func @transform_7(%arg0: i32, %arg1: i32) -> (i32, i32) {
    %c0_i32 = arith.constant 0 : i32
    %c0_i32_0 = arith.constant 0 : i32
    %c0_i32_1 = arith.constant 0 : i32
    return %c0_i32, %c0_i32_0 : i32, i32
  }
  func.func @transform_8(%arg0: i32, %arg1: i32) -> (i32, i32) {
    %c0_i32 = arith.constant 0 : i32
    %c0_i32_0 = arith.constant 0 : i32
    %c0_i32_1 = arith.constant 0 : i32
    return %c0_i32, %c0_i32_0 : i32, i32
  }
  func.func @transform_9(%arg0: i32, %arg1: i32) -> (i32, i32) {
    %c0_i32 = arith.constant 0 : i32
    %c0_i32_0 = arith.constant 0 : i32
    %c0_i32_1 = arith.constant 0 : i32
    return %c0_i32, %c0_i32_0 : i32, i32
  }
  func.func @transform_10(%arg0: i32, %arg1: i32) -> (i32, i32) {
    %c0_i32 = arith.constant 0 : i32
    %c0_i32_0 = arith.constant 0 : i32
    %c0_i32_1 = arith.constant 0 : i32
    return %c0_i32, %c0_i32_0 : i32, i32
  }
  func.func @transform_11(%arg0: i32, %arg1: i32) -> (i32, i32) {
    %c0_i32 = arith.constant 0 : i32
    %c0_i32_0 = arith.constant 0 : i32
    %c0_i32_1 = arith.constant 0 : i32
    return %c0_i32, %c0_i32_0 : i32, i32
  }
  func.func @transform_12(%arg0: i32, %arg1: i32) -> (i32, i32) {
    %c0_i32 = arith.constant 0 : i32
    %c0_i32_0 = arith.constant 0 : i32
    %c0_i32_1 = arith.constant 0 : i32
    return %c0_i32, %c0_i32_0 : i32, i32
  }
  func.func @transform_13(%arg0: i32, %arg1: i32) -> (i32, i32) {
    %c0_i32 = arith.constant 0 : i32
    %c0_i32_0 = arith.constant 0 : i32
    %c0_i32_1 = arith.constant 0 : i32
    return %c0_i32, %c0_i32_0 : i32, i32
  }
  func.func @transform_14(%arg0: i32, %arg1: i32) -> (i32, i32) {
    %c0_i32 = arith.constant 0 : i32
    %c0_i32_0 = arith.constant 0 : i32
    %c0_i32_1 = arith.constant 0 : i32
    return %c0_i32, %c0_i32_0 : i32, i32
  }
  func.func @transform_15(%arg0: i32, %arg1: i32) -> (i32, i32) {
    %c0_i32 = arith.constant 0 : i32
    %c0_i32_0 = arith.constant 0 : i32
    %c0_i32_1 = arith.constant 0 : i32
    return %c0_i32, %c0_i32_0 : i32, i32
  }
}

</mosaic_0001>

<llo_original>
// kernel: tpu_custom_call.1
$region0: #{tpu_custom_call.1}
  #allocation0 [shape = 'u32[]', space=smem, size = 0x4, offset = 0x4, fixed_abs, tag = 'smem constant byte address 0x4 - core index']
  #allocation1 [shape = 'u32[144,128]{1,0:T(1,128)}', space=vmem, size = 0x12000, scoped, tag = 'internal scratch']
  %s0 = inlined_call_operand.vmem [shape: f32[32,3], index: 0, kind: input, shape index: {}]
  %s1 = inlined_call_operand.vmem [shape: f32[3,32], index: 1, kind: input, shape index: {}]
  %s2 = inlined_call_operand.vmem [shape: f32[1,32], index: 2, kind: input, shape index: {}]
  %s3 = inlined_call_operand.vmem [shape: f32[1,32], index: 3, kind: input, shape index: {}]
  %s4 = inlined_call_operand.hbm [shape: bf16[32,64], index: 4, kind: input, shape index: {}]
  %s5 = inlined_call_operand.vmem [shape: f32[1,64], index: 5, kind: input, shape index: {}]
  %s6 = inlined_call_operand.vmem [shape: f32[1,64], index: 6, kind: input, shape index: {}]
  %s7 = inlined_call_operand.vmem [shape: bf16[64,64], index: 7, kind: input, shape index: {}]
  %s8 = inlined_call_operand.vmem [shape: bf16[64,64], index: 8, kind: input, shape index: {}]
  %s9 = inlined_call_operand.vmem [shape: f32[1,64], index: 9, kind: input, shape index: {}]
  %s10 = inlined_call_operand.vmem [shape: f32[1,64], index: 10, kind: input, shape index: {}]
  %s11 = inlined_call_operand.vmem [shape: bf16[64,32], index: 11, kind: input, shape index: {}]
  %s12 = inlined_call_operand.hbm [shape: f32[2,32], index: 12, kind: output, shape index: {0}]
  %s13 = inlined_call_operand.hbm [shape: f32[2,64], index: 13, kind: output, shape index: {1}]
  %s14 = inlined_call_operand.hbm [shape: f32[2,64], index: 14, kind: output, shape index: {2}]
  %s15 = inlined_call_operand.hbm [shape: f32[2,32], index: 15, kind: output, shape index: {3}]
  %16 = xla_tuple %s12, %s13, %s14, %s15
  %s17 = sld [smem:[#allocation0]]
  $region157: #{tpu_custom_call.1} parent=0
    _
  %s19 = ssub.s32 1, %s17
  %s20 = scalar_select 0, %s19, %s17
  $region1: #{tpu_custom_call.1} parent=0
    #allocation2 [shape = 'u8[8192]{0}', space=vmem, size = 0x2000, scoped, tag = 'input window, operand 4, single buffered']
    #allocation3 [shape = 's32[2]{0}', space=sflag, size = 0x8, scoped, tag = 'scoped memory for tpu_custom_call.1']
    #allocation4 [shape = 's32[2]{0}', space=sflag, size = 0x8, scoped, tag = 'scoped memory for tpu_custom_call.1']
    #allocation5 [shape = 'u8[1024]{0}', space=vmem, size = 0x400, scoped, tag = 'output window, operand 0, single buffered']
    #allocation6 [shape = 'u8[1024]{0}', space=vmem, size = 0x400, scoped, tag = 'output window, operand 1, single buffered']
    #allocation7 [shape = 's32[1]{0}', space=sflag, size = 0x4, scoped, tag = 'scoped memory for tpu_custom_call.1']
    #allocation8 [shape = 'u8[1024]{0}', space=vmem, size = 0x400, scoped, tag = 'output window, operand 2, single buffered']
    #allocation9 [shape = 'u8[1024]{0}', space=vmem, size = 0x400, scoped, tag = 'output window, operand 3, single buffered']
    #allocation10 [shape = 's32[1]{0}', space=sflag, size = 0x4, scoped, tag = 'scoped memory for tpu_custom_call.1']
    %21 = vsyncpa [#allocation3], 0
    %22 = vsyncpa [#allocation4], 0
    %23 = vsyncpa [#allocation7], 0
    %24 = vsyncpa [#allocation10], 0
    loop: start=0, step=1, limit=10
    $region2: #{tpu_custom_call.1} parent=1 // loop_pre_header
      _
    $region3: #{tpu_custom_call.1} parent=1 // loop_header
      %s26 = sphi 0, %s30
      %p27 = scmp.ge.s32.totalorder %s26, 10
      %s33 = sphi 0, %s45
      %s34 = sphi 0, %s41
      %s35 = sphi 0, %s33
      %s36 = sphi 0, %s34
      %s37 = sphi 0, %s35
      %s38 = sphi 0, %s36
      %s48 = sphi 0, %s50
      %s51 = sphi 0, %s48
      %s52 = sphi 0, %s51
      %s68 = sphi 0, %s52
      %s72 = sphi 0, %s72
      %s74 = sphi 0, %s72
      %s75 = sphi 0, %s74
      %s89 = sphi 0, %s75
      %s93 = sphi 0, %s93
      %s95 = sphi 0, %s93
      %s96 = sphi 0, %s95
      %s110 = sphi 0, %s96
      %s114 = sphi 0, %s114
      %s116 = sphi 0, %s114
      %s117 = sphi 0, %s116
      %s131 = sphi 0, %s117
      %s135 = sphi 0, %s135
      %s137 = sphi 0, %s135
      %s138 = sphi 0, %s137
      %s152 = sphi 0, %s138
      %s156 = sphi 0, %s156
      %s158 = sphi 0, %s156
      %s159 = sphi 0, %s158
      %s173 = sphi 0, %s159
      %s177 = sphi 0, %s177
      %s179 = sphi 0, %s177
      %s180 = sphi 0, %s179
      %s194 = sphi 0, %s180
      %s198 = sphi 0, %s198
      %s200 = sphi 0, %s198
      %s201 = sphi 0, %s200
      %s215 = sphi 0, %s201
      %s219 = sphi 0, %s219
      %s221 = sphi 0, %s219
      %s222 = sphi 0, %s221
      %s236 = sphi 0, %s222
      %s240 = sphi 0, %s240
      %s242 = sphi 0, %s240
      %s243 = sphi 0, %s242
      %s257 = sphi 0, %s243
      %s261 = sphi 0, %s261
      %s263 = sphi 0, %s261
      %s264 = sphi 0, %s263
      %s278 = sphi 0, %s264
      %s282 = sphi 0, %s282
      %s284 = sphi 0, %s282
      %s285 = sphi 0, %s284
      %s299 = sphi 0, %s285
      %s303 = sphi 0, %s303
      %s305 = sphi 0, %s303
      %s306 = sphi 0, %s305
      %s320 = sphi 0, %s306
      %s324 = sphi 0, %s324
      %s326 = sphi 0, %s324
      %s327 = sphi 0, %s326
      %s341 = sphi 0, %s327
      %s345 = sphi 0, %s345
      %s347 = sphi 0, %s345
      %s348 = sphi 0, %s347
      %s362 = sphi 0, %s348
      %s366 = sphi 0, %s366
      %s368 = sphi 0, %s366
      %s369 = sphi 0, %s368
      %s383 = sphi 0, %s369
    $region4: #{tpu_custom_call.1} parent=1 // loop_header_branch
      %29 = sbr.rel (%p27) target = $region8
    $region5: #{tpu_custom_call.1} parent=1 // loop_body
      %s31 = ssub.s32 %s26, 1
      %s32 = ssub.s32 %s26, 2
      %s39 = sadd.s32 1, %s34
      %p40 = scmp.ge.s32.totalorder %s39, 2
      %s41 = scalar_select %p40, 0, %s39
      %s42 = sadd.s32 1, %s33
      %s43 = scalar_select %p40, %s42, %s33
      %p44 = scmp.ge.s32.totalorder %s43, 4
      %s45 = scalar_select %p44, 0, %s43
      %s46 = ssub.s32 %s34, %s41
      %p47 = scmp.eq.s32.totalorder %s46, 0
      %s49 = sadd.s32 %s48, 1
      %s50 = scalar_select %p47, %s48, %s49
      %p53 = pneg %p47
      %p54 = scmp.eq.s32.totalorder %s26, 7
      %p55 = por %p53, %p54
      %p56 = scmp.ne.s32.totalorder %s48, %s51
      %p57 = scmp.eq.s32.totalorder %s26, 0
      %p58 = por %p56, %p57
      %p59 = scmp.ne.s32.totalorder %s48, %s51
      %p60 = scmp.eq.s32.totalorder %s31, 7
      %p61 = por %p59, %p60
      %p62 = scmp.ne.s32.totalorder %s51, %s52
      %p63 = scmp.eq.s32.totalorder %s31, 0
      %p64 = por %p62, %p63
      %p65 = scmp.ne.s32.totalorder %s51, %s52
      %p66 = scmp.eq.s32.totalorder %s32, 7
      %p67 = por %p65, %p66
      %p69 = scmp.ne.s32.totalorder %s52, %s68
      %p70 = scmp.eq.s32.totalorder %s32, 0
      %p71 = por %p69, %p70
      %s73 = sadd.s32 %s72, 1
      %p76 = scmp.eq.s32.totalorder %s26, 7
      %p77 = scmp.ne.s32.totalorder %s72, %s74
      %p78 = scmp.eq.s32.totalorder %s26, 0
      %p79 = por %p77, %p78
      %p80 = scmp.ne.s32.totalorder %s72, %s74
      %p81 = scmp.eq.s32.totalorder %s31, 7
      %p82 = por %p80, %p81
      %p83 = scmp.ne.s32.totalorder %s74, %s75
      %p84 = scmp.eq.s32.totalorder %s31, 0
      %p85 = por %p83, %p84
      %p86 = scmp.ne.s32.totalorder %s74, %s75
      %p87 = scmp.eq.s32.totalorder %s32, 7
      %p88 = por %p86, %p87
      %p90 = scmp.ne.s32.totalorder %s75, %s89
      %p91 = scmp.eq.s32.totalorder %s32, 0
      %p92 = por %p90, %p91
      %s94 = sadd.s32 %s93, 1
      %p97 = scmp.eq.s32.totalorder %s26, 7
      %p98 = scmp.ne.s32.totalorder %s93, %s95
      %p99 = scmp.eq.s32.totalorder %s26, 0
      %p100 = por %p98, %p99
      %p101 = scmp.ne.s32.totalorder %s93, %s95
      %p102 = scmp.eq.s32.totalorder %s31, 7
      %p103 = por %p101, %p102
      %p104 = scmp.ne.s32.totalorder %s95, %s96
      %p105 = scmp.eq.s32.totalorder %s31, 0
      %p106 = por %p104, %p105
      %p107 = scmp.ne.s32.totalorder %s95, %s96
      %p108 = scmp.eq.s32.totalorder %s32, 7
      %p109 = por %p107, %p108
      %p111 = scmp.ne.s32.totalorder %s96, %s110
      %p112 = scmp.eq.s32.totalorder %s32, 0
      %p113 = por %p111, %p112
      %s115 = sadd.s32 %s114, 1
      %p118 = scmp.eq.s32.totalorder %s26, 7
      %p119 = scmp.ne.s32.totalorder %s114, %s116
      %p120 = scmp.eq.s32.totalorder %s26, 0
      %p121 = por %p119, %p120
      %p122 = scmp.ne.s32.totalorder %s114, %s116
      %p123 = scmp.eq.s32.totalorder %s31, 7
      %p124 = por %p122, %p123
      %p125 = scmp.ne.s32.totalorder %s116, %s117
      %p126 = scmp.eq.s32.totalorder %s31, 0
      %p127 = por %p125, %p126
      %p128 = scmp.ne.s32.totalorder %s116, %s117
      %p129 = scmp.eq.s32.totalorder %s32, 7
      %p130 = por %p128, %p129
      %p132 = scmp.ne.s32.totalorder %s117, %s131
      %p133 = scmp.eq.s32.totalorder %s32, 0
      %p134 = por %p132, %p133
      %s136 = sadd.s32 %s135, 1
      %p139 = scmp.eq.s32.totalorder %s26, 7
      %p140 = scmp.ne.s32.totalorder %s135, %s137
      %p141 = scmp.eq.s32.totalorder %s26, 0
      %p142 = por %p140, %p141
      %p143 = scmp.ne.s32.totalorder %s135, %s137
      %p144 = scmp.eq.s32.totalorder %s31, 7
      %p145 = por %p143, %p144
      %p146 = scmp.ne.s32.totalorder %s137, %s138
      %p147 = scmp.eq.s32.totalorder %s31, 0
      %p148 = por %p146, %p147
      %p149 = scmp.ne.s32.totalorder %s137, %s138
      %p150 = scmp.eq.s32.totalorder %s32, 7
      %p151 = por %p149, %p150
      %p153 = scmp.ne.s32.totalorder %s138, %s152
      %p154 = scmp.eq.s32.totalorder %s32, 0
      %p155 = por %p153, %p154
      %s157 = sadd.s32 %s156, 1
      %p160 = scmp.eq.s32.totalorder %s26, 7
      %p161 = scmp.ne.s32.totalorder %s156, %s158
      %p162 = scmp.eq.s32.totalorder %s26, 0
      %p163 = por %p161, %p162
      %p164 = scmp.ne.s32.totalorder %s156, %s158
      %p165 = scmp.eq.s32.totalorder %s31, 7
      %p166 = por %p164, %p165
      %p167 = scmp.ne.s32.totalorder %s158, %s159
      %p168 = scmp.eq.s32.totalorder %s31, 0
      %p169 = por %p167, %p168
      %p170 = scmp.ne.s32.totalorder %s158, %s159
      %p171 = scmp.eq.s32.totalorder %s32, 7
      %p172 = por %p170, %p171
      %p174 = scmp.ne.s32.totalorder %s159, %s173
      %p175 = scmp.eq.s32.totalorder %s32, 0
      %p176 = por %p174, %p175
      %s178 = sadd.s32 %s177, 1
      %p181 = scmp.eq.s32.totalorder %s26, 7
      %p182 = scmp.ne.s32.totalorder %s177, %s179
      %p183 = scmp.eq.s32.totalorder %s26, 0
      %p184 = por %p182, %p183
      %p185 = scmp.ne.s32.totalorder %s177, %s179
      %p186 = scmp.eq.s32.totalorder %s31, 7
      %p187 = por %p185, %p186
      %p188 = scmp.ne.s32.totalorder %s179, %s180
      %p189 = scmp.eq.s32.totalorder %s31, 0
      %p190 = por %p188, %p189
      %p191 = scmp.ne.s32.totalorder %s179, %s180
      %p192 = scmp.eq.s32.totalorder %s32, 7
      %p193 = por %p191, %p192
      %p195 = scmp.ne.s32.totalorder %s180, %s194
      %p196 = scmp.eq.s32.totalorder %s32, 0
      %p197 = por %p195, %p196
      %s199 = sadd.s32 %s198, 1
      %p202 = scmp.eq.s32.totalorder %s26, 7
      %p203 = scmp.ne.s32.totalorder %s198, %s200
      %p204 = scmp.eq.s32.totalorder %s26, 0
      %p205 = por %p203, %p204
      %p206 = scmp.ne.s32.totalorder %s198, %s200
      %p207 = scmp.eq.s32.totalorder %s31, 7
      %p208 = por %p206, %p207
      %p209 = scmp.ne.s32.totalorder %s200, %s201
      %p210 = scmp.eq.s32.totalorder %s31, 0
      %p211 = por %p209, %p210
      %p212 = scmp.ne.s32.totalorder %s200, %s201
      %p213 = scmp.eq.s32.totalorder %s32, 7
      %p214 = por %p212, %p213
      %p216 = scmp.ne.s32.totalorder %s201, %s215
      %p217 = scmp.eq.s32.totalorder %s32, 0
      %p218 = por %p216, %p217
      %s220 = sadd.s32 %s219, 1
      %p223 = scmp.eq.s32.totalorder %s26, 7
      %p224 = scmp.ne.s32.totalorder %s219, %s221
      %p225 = scmp.eq.s32.totalorder %s26, 0
      %p226 = por %p224, %p225
      %p227 = scmp.ne.s32.totalorder %s219, %s221
      %p228 = scmp.eq.s32.totalorder %s31, 7
      %p229 = por %p227, %p228
      %p230 = scmp.ne.s32.totalorder %s221, %s222
      %p231 = scmp.eq.s32.totalorder %s31, 0
      %p232 = por %p230, %p231
      %p233 = scmp.ne.s32.totalorder %s221, %s222
      %p234 = scmp.eq.s32.totalorder %s32, 7
      %p235 = por %p233, %p234
      %p237 = scmp.ne.s32.totalorder %s222, %s236
      %p238 = scmp.eq.s32.totalorder %s32, 0
      %p239 = por %p237, %p238
      %s241 = sadd.s32 %s240, 1
      %p244 = scmp.eq.s32.totalorder %s26, 7
      %p245 = scmp.ne.s32.totalorder %s240, %s242
      %p246 = scmp.eq.s32.totalorder %s26, 0
      %p247 = por %p245, %p246
      %p248 = scmp.ne.s32.totalorder %s240, %s242
      %p249 = scmp.eq.s32.totalorder %s31, 7
      %p250 = por %p248, %p249
      %p251 = scmp.ne.s32.totalorder %s242, %s243
      %p252 = scmp.eq.s32.totalorder %s31, 0
      %p253 = por %p251, %p252
      %p254 = scmp.ne.s32.totalorder %s242, %s243
      %p255 = scmp.eq.s32.totalorder %s32, 7
      %p256 = por %p254, %p255
      %p258 = scmp.ne.s32.totalorder %s243, %s257
      %p259 = scmp.eq.s32.totalorder %s32, 0
      %p260 = por %p258, %p259
      %s262 = sadd.s32 %s261, 1
      %p265 = scmp.eq.s32.totalorder %s26, 7
      %p266 = scmp.ne.s32.totalorder %s261, %s263
      %p267 = scmp.eq.s32.totalorder %s26, 0
      %p268 = por %p266, %p267
      %p269 = scmp.ne.s32.totalorder %s261, %s263
      %p270 = scmp.eq.s32.totalorder %s31, 7
      %p271 = por %p269, %p270
      %p272 = scmp.ne.s32.totalorder %s263, %s264
      %p273 = scmp.eq.s32.totalorder %s31, 0
      %p274 = por %p272, %p273
      %p275 = scmp.ne.s32.totalorder %s263, %s264
      %p276 = scmp.eq.s32.totalorder %s32, 7
      %p277 = por %p275, %p276
      %p279 = scmp.ne.s32.totalorder %s264, %s278
      %p280 = scmp.eq.s32.totalorder %s32, 0
      %p281 = por %p279, %p280
      %s283 = sadd.s32 %s282, 1
      %p286 = scmp.eq.s32.totalorder %s26, 7
      %p287 = scmp.ne.s32.totalorder %s282, %s284
      %p288 = scmp.eq.s32.totalorder %s26, 0
      %p289 = por %p287, %p288
      %p290 = scmp.ne.s32.totalorder %s282, %s284
      %p291 = scmp.eq.s32.totalorder %s31, 7
      %p292 = por %p290, %p291
      %p293 = scmp.ne.s32.totalorder %s284, %s285
      %p294 = scmp.eq.s32.totalorder %s31, 0
      %p295 = por %p293, %p294
      %p296 = scmp.ne.s32.totalorder %s284, %s285
      %p297 = scmp.eq.s32.totalorder %s32, 7
      %p298 = por %p296, %p297
      %p300 = scmp.ne.s32.totalorder %s285, %s299
      %p301 = scmp.eq.s32.totalorder %s32, 0
      %p302 = por %p300, %p301
      %s304 = sadd.s32 %s303, 1
      %p307 = scmp.eq.s32.totalorder %s26, 7
      %p308 = scmp.ne.s32.totalorder %s303, %s305
      %p309 = scmp.eq.s32.totalorder %s26, 0
      %p310 = por %p308, %p309
      %p311 = scmp.ne.s32.totalorder %s303, %s305
      %p312 = scmp.eq.s32.totalorder %s31, 7
      %p313 = por %p311, %p312
      %p314 = scmp.ne.s32.totalorder %s305, %s306
      %p315 = scmp.eq.s32.totalorder %s31, 0
      %p316 = por %p314, %p315
      %p317 = scmp.ne.s32.totalorder %s305, %s306
      %p318 = scmp.eq.s32.totalorder %s32, 7
      %p319 = por %p317, %p318
      %p321 = scmp.ne.s32.totalorder %s306, %s320
      %p322 = scmp.eq.s32.totalorder %s32, 0
      %p323 = por %p321, %p322
      %s325 = sadd.s32 %s324, 1
      %p328 = scmp.eq.s32.totalorder %s26, 7
      %p329 = scmp.ne.s32.totalorder %s324, %s326
      %p330 = scmp.eq.s32.totalorder %s26, 0
      %p331 = por %p329, %p330
      %p332 = scmp.ne.s32.totalorder %s324, %s326
      %p333 = scmp.eq.s32.totalorder %s31, 7
      %p334 = por %p332, %p333
      %p335 = scmp.ne.s32.totalorder %s326, %s327
      %p336 = scmp.eq.s32.totalorder %s31, 0
      %p337 = por %p335, %p336
      %p338 = scmp.ne.s32.totalorder %s326, %s327
      %p339 = scmp.eq.s32.totalorder %s32, 7
      %p340 = por %p338, %p339
      %p342 = scmp.ne.s32.totalorder %s327, %s341
      %p343 = scmp.eq.s32.totalorder %s32, 0
      %p344 = por %p342, %p343
      %s346 = sadd.s32 %s345, 1
      %p349 = scmp.eq.s32.totalorder %s26, 7
      %p350 = scmp.ne.s32.totalorder %s345, %s347
      %p351 = scmp.eq.s32.totalorder %s26, 0
      %p352 = por %p350, %p351
      %p353 = scmp.ne.s32.totalorder %s345, %s347
      %p354 = scmp.eq.s32.totalorder %s31, 7
      %p355 = por %p353, %p354
      %p356 = scmp.ne.s32.totalorder %s347, %s348
      %p357 = scmp.eq.s32.totalorder %s31, 0
      %p358 = por %p356, %p357
      %p359 = scmp.ne.s32.totalorder %s347, %s348
      %p360 = scmp.eq.s32.totalorder %s32, 7
      %p361 = por %p359, %p360
      %p363 = scmp.ne.s32.totalorder %s348, %s362
      %p364 = scmp.eq.s32.totalorder %s32, 0
      %p365 = por %p363, %p364
      %s367 = sadd.s32 %s366, 1
      %p370 = scmp.eq.s32.totalorder %s26, 7
      %p371 = scmp.ne.s32.totalorder %s366, %s368
      %p372 = scmp.eq.s32.totalorder %s26, 0
      %p373 = por %p371, %p372
      %p374 = scmp.ne.s32.totalorder %s366, %s368
      %p375 = scmp.eq.s32.totalorder %s31, 7
      %p376 = por %p374, %p375
      %p377 = scmp.ne.s32.totalorder %s368, %s369
      %p378 = scmp.eq.s32.totalorder %s31, 0
      %p379 = por %p377, %p378
      %p380 = scmp.ne.s32.totalorder %s368, %s369
      %p381 = scmp.eq.s32.totalorder %s32, 7
      %p382 = por %p380, %p381
      %p384 = scmp.ne.s32.totalorder %s369, %s383
      %p385 = scmp.eq.s32.totalorder %s32, 0
      %p386 = por %p384, %p385
      %p387 = scmp.le.s32.totalorder 1, %s26
      %p388 = scmp.lt.s32.totalorder %s26, 9
      %p389 = pnand %p387, %p388
      %p390 = pneg %p389
      // Predicated region
      $region9: #{tpu_custom_call.1} parent=5 // pred_check
        _
      $region10: #{tpu_custom_call.1} parent=5 // pred_check_branch
        %392 = sbr.rel (%p389) target = $region12
      $region11: #{tpu_custom_call.1} parent=5 // pred_region
        %s393 = ssub.s32 %s26, 1
        // Predicated region
        $region13: #{tpu_custom_call.1} parent=11 // pred_check
          %p394 = pneg %p85
        $region14: #{tpu_custom_call.1} parent=11 // pred_check_branch
          %396 = sbr.rel (%p394) target = $region16
        $region15: #{tpu_custom_call.1} parent=11 // pred_region
          _
        $region16: #{tpu_custom_call.1} parent=11 // pred_fallthru
          _
        // Predicated region
        $region17: #{tpu_custom_call.1} parent=11 // pred_check
          %p397 = pneg %p106
        $region18: #{tpu_custom_call.1} parent=11 // pred_check_branch
          %399 = sbr.rel (%p397) target = $region20
        $region19: #{tpu_custom_call.1} parent=11 // pred_region
          _
        $region20: #{tpu_custom_call.1} parent=11 // pred_fallthru
          _
        // Predicated region
        $region21: #{tpu_custom_call.1} parent=11 // pred_check
          %p400 = pneg %p127
        $region22: #{tpu_custom_call.1} parent=11 // pred_check_branch
          %402 = sbr.rel (%p400) target = $region24
        $region23: #{tpu_custom_call.1} parent=11 // pred_region
          _
        $region24: #{tpu_custom_call.1} parent=11 // pred_fallthru
          _
        // Predicated region
        $region25: #{tpu_custom_call.1} parent=11 // pred_check
          %p403 = pneg %p148
        $region26: #{tpu_custom_call.1} parent=11 // pred_check_branch
          %405 = sbr.rel (%p403) target = $region28
        $region27: #{tpu_custom_call.1} parent=11 // pred_region
          %s407 = ssub.s32 256, 256
          %408 = vsyncadd [#allocation3], %s407
          %s409 = sshll.u32 [#allocation2], 4
          %s410 = int_to_ptr.vmem [resolvable:$true] %s409
          %415 = dma.hbm_to_vmem [thread:$0]  %s4, 256, %s410, [#allocation3], 64, 64, 4
        $region28: #{tpu_custom_call.1} parent=11 // pred_fallthru
          _
        // Predicated region
        $region29: #{tpu_custom_call.1} parent=11 // pred_check
          %p416 = pneg %p169
        $region30: #{tpu_custom_call.1} parent=11 // pred_check_branch
          %418 = sbr.rel (%p416) target = $region32
        $region31: #{tpu_custom_call.1} parent=11 // pred_region
          _
        $region32: #{tpu_custom_call.1} parent=11 // pred_fallthru
          _
        // Predicated region
        $region33: #{tpu_custom_call.1} parent=11 // pred_check
          %p419 = pneg %p190
        $region34: #{tpu_custom_call.1} parent=11 // pred_check_branch
          %421 = sbr.rel (%p419) target = $region36
        $region35: #{tpu_custom_call.1} parent=11 // pred_region
          _
        $region36: #{tpu_custom_call.1} parent=11 // pred_fallthru
          _
        // Predicated region
        $region37: #{tpu_custom_call.1} parent=11 // pred_check
          %p422 = pneg %p211
        $region38: #{tpu_custom_call.1} parent=11 // pred_check_branch
          %424 = sbr.rel (%p422) target = $region40
        $region39: #{tpu_custom_call.1} parent=11 // pred_region
          _
        $region40: #{tpu_custom_call.1} parent=11 // pred_fallthru
          _
        // Predicated region
        $region41: #{tpu_custom_call.1} parent=11 // pred_check
          %p425 = pneg %p232
        $region42: #{tpu_custom_call.1} parent=11 // pred_check_branch
          %427 = sbr.rel (%p425) target = $region44
        $region43: #{tpu_custom_call.1} parent=11 // pred_region
          _
        $region44: #{tpu_custom_call.1} parent=11 // pred_fallthru
          _
        // Predicated region
        $region45: #{tpu_custom_call.1} parent=11 // pred_check
          %p428 = pneg %p253
        $region46: #{tpu_custom_call.1} parent=11 // pred_check_branch
          %430 = sbr.rel (%p428) target = $region48
        $region47: #{tpu_custom_call.1} parent=11 // pred_region
          _
        $region48: #{tpu_custom_call.1} parent=11 // pred_fallthru
          _
        // Predicated region
        $region49: #{tpu_custom_call.1} parent=11 // pred_check
          %p431 = pneg %p274
        $region50: #{tpu_custom_call.1} parent=11 // pred_check_branch
          %433 = sbr.rel (%p431) target = $region52
        $region51: #{tpu_custom_call.1} parent=11 // pred_region
          _
        $region52: #{tpu_custom_call.1} parent=11 // pred_fallthru
          _
        // Predicated region
        $region53: #{tpu_custom_call.1} parent=11 // pred_check
          %p434 = pneg %p295
        $region54: #{tpu_custom_call.1} parent=11 // pred_check_branch
          %436 = sbr.rel (%p434) target = $region56
        $region55: #{tpu_custom_call.1} parent=11 // pred_region
          _
        $region56: #{tpu_custom_call.1} parent=11 // pred_fallthru
          _
      $region12: #{tpu_custom_call.1} parent=5 // pred_fallthru
        _
      %p437 = scmp.lt.s32.totalorder %s26, 8
      // Predicated region
      $region57: #{tpu_custom_call.1} parent=5 // pred_check
        %p438 = pneg %p437
      $region58: #{tpu_custom_call.1} parent=5 // pred_check_branch
        %440 = sbr.rel (%p438) target = $region60
      $region59: #{tpu_custom_call.1} parent=5 // pred_region
        // Predicated region
        $region61: #{tpu_custom_call.1} parent=59 // pred_check
          %p441 = pneg %p58
        $region62: #{tpu_custom_call.1} parent=59 // pred_check_branch
          %443 = sbr.rel (%p441) target = $region64
        $region63: #{tpu_custom_call.1} parent=59 // pred_region
          %s444 = smul.u32 2, %s34
          %p445 = scmp.lt.s32.totalorder %s444, 3
          %s446 = scalar_select %p445, %s444, 3
          %s447 = smul.addr %s446, 8
          %s448 = scalar_lea.vmem %s0, %s447
          %s449 = smul.u32 2, %s34
        $region64: #{tpu_custom_call.1} parent=59 // pred_fallthru
          _
      $region60: #{tpu_custom_call.1} parent=5 // pred_fallthru
        _
      %p450 = scmp.le.s32.totalorder 1, %s26
      %p451 = scmp.lt.s32.totalorder %s26, 9
      %p452 = pnand %p450, %p451
      %p453 = pneg %p452
      // Predicated region
      $region65: #{tpu_custom_call.1} parent=5 // pred_check
        _
      $region66: #{tpu_custom_call.1} parent=5 // pred_check_branch
        %455 = sbr.rel (%p452) target = $region68
      $region67: #{tpu_custom_call.1} parent=5 // pred_region
        %s456 = ssub.s32 %s26, 1
        // Predicated region
        $region69: #{tpu_custom_call.1} parent=67 // pred_check
          %p457 = pneg %p148
        $region70: #{tpu_custom_call.1} parent=67 // pred_check_branch
          %459 = sbr.rel (%p457) target = $region72
        $region71: #{tpu_custom_call.1} parent=67 // pred_region
          %460 = dma.done [#allocation3], 256
        $region72: #{tpu_custom_call.1} parent=67 // pred_fallthru
          _
        %s461 = smul.u32 2, %s36
        %p462 = scmp.lt.s32.totalorder %s461, 3
        %s463 = scalar_select %p462, %s461, 3
        %s464 = smul.addr %s463, 8
        %s465 = scalar_lea.vmem %s0, %s464
        %p466 = pneg %p64
        %p467 = pneg %p61
        %p468 = pneg %p85
        %p469 = pneg %p82
        %p470 = pneg %p106
        %p471 = pneg %p103
        %p472 = pneg %p127
        %p473 = pneg %p124
        %p474 = pneg %p148
        %p475 = pneg %p145
        %p476 = pneg %p169
        %p477 = pneg %p166
        %p478 = pneg %p190
        %p479 = pneg %p187
        %p480 = pneg %p211
        %p481 = pneg %p208
        %p482 = pneg %p232
        %p483 = pneg %p229
        %p484 = pneg %p253
        %p485 = pneg %p250
        %p486 = pneg %p274
        %p487 = pneg %p271
        %p488 = pneg %p295
        %p489 = pneg %p292
        %p490 = pneg %p316
        %p491 = pneg %p313
        %p492 = pneg %p337
        %p493 = pneg %p334
        %p494 = pneg %p358
        %p495 = pneg %p355
        %p496 = pneg %p379
        %p497 = pneg %p376
        %s498 = smul.u32 2, %s36
        %p499 = scmp.lt.s32.totalorder %s498, 3
        %s500 = scalar_select %p499, %s498, 3
        %s501 = smul.addr %s500, 8
        %s502 = scalar_lea.vmem %s0, %s501
        %s503 = smul.u32 2, %s36
        %v505 = vld [vmem:[%s502] sm:$0xff]
        %v506 = vld [vmem:[%s502 + $0x8] sm:$0xff]
        %p507 = scmp.eq.s32.totalorder %s35, 0
        // Predicated region
        $region73: #{tpu_custom_call.1} parent=67 // pred_check
          %p508 = pneg %p507
        $region74: #{tpu_custom_call.1} parent=67 // pred_check_branch
          %510 = sbr.rel (%p508) target = $region76
        $region75: #{tpu_custom_call.1} parent=67 // pred_region
          %v511 = vld [vmem:[%s1] sm:$0x7]
          %513 = vset.pattern.permute.xlu0 0
          %514 = vperm.xlu0 %513, %v505
          %v515 = vpop.permute.xlu0 %514
          %518 = vset.pattern.permute.xlu0 0
          %519 = vperm.xlu0 %518, %v506
          %v520 = vpop.permute.xlu0 %519
          %v522 = vlaneseq
          %v523 = vshrl.u32 %v522, 7
          %v524 = vsub.s32 0, %v523
          %v525 = vrot.slane %v511, %v524
          %v526 = vmul.f32 %v515, %v525
          %v527 = vmul.f32 %v520, %v525
          %528 = vset.pattern.permute.xlu0 1
          %529 = vperm.xlu0 %528, %v505
          %v530 = vpop.permute.xlu0 %529
          %532 = vset.pattern.permute.xlu0 1
          %533 = vperm.xlu0 %532, %v506
          %v534 = vpop.permute.xlu0 %533
          %v536 = vlaneseq
          %v537 = vshrl.u32 %v536, 7
          %v538 = vsub.s32 1, %v537
          %v539 = vrot.slane %v511, %v538
          %v540 = vmul.f32 %v530, %v539
          %v541 = vmul.f32 %v534, %v539
          %v542 = vadd.f32 %v526, %v540
          %v543 = vadd.f32 %v527, %v541
          %544 = vset.pattern.permute.xlu0 2
          %545 = vperm.xlu0 %544, %v505
          %v546 = vpop.permute.xlu0 %545
          %548 = vset.pattern.permute.xlu0 2
          %549 = vperm.xlu0 %548, %v506
          %v550 = vpop.permute.xlu0 %549
          %v552 = vlaneseq
          %v553 = vshrl.u32 %v552, 7
          %v554 = vsub.s32 2, %v553
          %v555 = vrot.slane %v511, %v554
          %v556 = vmul.f32 %v546, %v555
          %v557 = vmul.f32 %v550, %v555
          %v558 = vadd.f32 %v542, %v556
          %v559 = vadd.f32 %v543, %v557
          %vm560 = vcmask 261120
          %v561 = vsel %vm560, %v558, 0.0
          %v562 = vsel %vm560, %v559, 0.0
          %v563 = vadd.f32 %v561, %v562
          %v564 = vrot.slane %v563, 4
          %v565 = vadd.f32 %v563, %v564
          %v566 = vrot.slane %v565, 2
          %v567 = vadd.f32 %v565, %v566
          %v568 = vrot.slane %v567, 1
          %v569 = vadd.f32 %v567, %v568
          %v570 = vmul.f32 %v569, 0.0625
          %v571 = vsub.f32 %v558, %v570
          %v572 = vsub.f32 %v559, %v570
          %v573 = vmul.f32 %v571, %v571
          %v574 = vmul.f32 %v572, %v572
          %v575 = vsel %vm560, %v573, 0.0
          %v576 = vsel %vm560, %v574, 0.0
          %v577 = vadd.f32 %v575, %v576
          %v578 = vrot.slane %v577, 4
          %v579 = vadd.f32 %v577, %v578
          %v580 = vrot.slane %v579, 2
          %v581 = vadd.f32 %v579, %v580
          %v582 = vrot.slane %v581, 1
          %v583 = vadd.f32 %v581, %v582
          %p584 = scmp.eq.s32.totalorder %s36, 0
          // Predicated region
          $region77: #{tpu_custom_call.1} parent=75 // pred_check
            %p585 = pneg %p584
          $region78: #{tpu_custom_call.1} parent=75 // pred_check_branch
            %587 = sbr.rel (%p585) target = $region80
          $region79: #{tpu_custom_call.1} parent=75 // pred_region
            %vm588 = vcmask 253952
            %589 = vst.msk [vmem:[#allocation5] sm:$0x1] %vm588, %v570
            %590 = vst.msk [vmem:[#allocation5 + $0x1] sm:$0x1] %vm588, %v583
          $region80: #{tpu_custom_call.1} parent=75 // pred_fallthru
            _
          %p591 = scmp.ne.s32.totalorder %s36, 0
          // Predicated region
          $region81: #{tpu_custom_call.1} parent=75 // pred_check
            %p592 = pneg %p591
          $region82: #{tpu_custom_call.1} parent=75 // pred_check_branch
            %594 = sbr.rel (%p592) target = $region84
          $region83: #{tpu_custom_call.1} parent=75 // pred_region
            %s595 = smul.u32 %s36, 16
            %s596 = scvt.s32.f32 %s595
            %s597 = sadd.f32 %s596, 16.0
            %v598 = vstv %s597
            %v599 = vrcp.pop %v598
            %s600 = vtos %v599
            %s601 = smul.f32 16.0, %s600
            %v602 = vld [vmem:[#allocation5] sm:$0x1]
            %v603 = vsub.f32 %v570, %v602
            %v604 = vstv %s601
            %v605 = vmul.f32 %v603, %v604
            %v606 = vadd.f32 %v602, %v605
            %vm607 = vcmask 253952
            %608 = vst.msk [vmem:[#allocation5] sm:$0x1] %vm607, %v606
            %v609 = vld [vmem:[#allocation5 + $0x1] sm:$0x1]
            %v610 = vadd.f32 %v609, %v583
            %v611 = vmul.f32 %v603, %v603
            %s612 = smul.f32 %s596, %s601
            %v613 = vstv %s612
            %v614 = vmul.f32 %v611, %v613
            %v615 = vadd.f32 %v610, %v614
            %616 = vst.msk [vmem:[#allocation5 + $0x1] sm:$0x1] %vm607, %v615
          $region84: #{tpu_custom_call.1} parent=75 // pred_fallthru
            _
        $region76: #{tpu_custom_call.1} parent=67 // pred_fallthru
          _
        %p617 = scmp.eq.s32.totalorder %s35, 1
        // Predicated region
        $region85: #{tpu_custom_call.1} parent=67 // pred_check
          %p618 = pneg %p617
        $region86: #{tpu_custom_call.1} parent=67 // pred_check_branch
          %620 = sbr.rel (%p618) target = $region88
        $region87: #{tpu_custom_call.1} parent=67 // pred_region
          %v621 = vld [vmem:[%s1] sm:$0x7]
          %623 = vset.pattern.permute.xlu0 0
          %624 = vperm.xlu0 %623, %v505
          %v625 = vpop.permute.xlu0 %624
          %628 = vset.pattern.permute.xlu0 0
          %629 = vperm.xlu0 %628, %v506
          %v630 = vpop.permute.xlu0 %629
          %v632 = vlaneseq
          %v633 = vshrl.u32 %v632, 7
          %v634 = vsub.s32 0, %v633
          %v635 = vrot.slane %v621, %v634
          %v636 = vmul.f32 %v625, %v635
          %v637 = vmul.f32 %v630, %v635
          %638 = vset.pattern.permute.xlu0 1
          %639 = vperm.xlu0 %638, %v505
          %v640 = vpop.permute.xlu0 %639
          %642 = vset.pattern.permute.xlu0 1
          %643 = vperm.xlu0 %642, %v506
          %v644 = vpop.permute.xlu0 %643
          %v646 = vlaneseq
          %v647 = vshrl.u32 %v646, 7
          %v648 = vsub.s32 1, %v647
          %v649 = vrot.slane %v621, %v648
          %v650 = vmul.f32 %v640, %v649
          %v651 = vmul.f32 %v644, %v649
          %v652 = vadd.f32 %v636, %v650
          %v653 = vadd.f32 %v637, %v651
          %654 = vset.pattern.permute.xlu0 2
          %655 = vperm.xlu0 %654, %v505
          %v656 = vpop.permute.xlu0 %655
          %658 = vset.pattern.permute.xlu0 2
          %659 = vperm.xlu0 %658, %v506
          %v660 = vpop.permute.xlu0 %659
          %v662 = vlaneseq
          %v663 = vshrl.u32 %v662, 7
          %v664 = vsub.s32 2, %v663
          %v665 = vrot.slane %v621, %v664
          %v666 = vmul.f32 %v656, %v665
          %v667 = vmul.f32 %v660, %v665
          %v668 = vadd.f32 %v652, %v666
          %v669 = vadd.f32 %v653, %v667
          %v670 = vld [vmem:[#allocation5] sm:$0x1]
          %v671 = vld [vmem:[#allocation5 + $0x1] sm:$0x1]
          %v672 = vmul.f32 %v671, 0.03125
          %v673 = vld [vmem:[%s2] sm:$0x1]
          %v674 = vadd.f32 %v672, 1e-05
          %v675 = vrsqrt.pop %v674
          %v676 = vmul.f32 %v673, %v675
          %v677 = vld [vmem:[%s3] sm:$0x1]
          %v678 = vmul.f32 %v670, %v676
          %v679 = vsub.f32 %v677, %v678
          %v681 = vlaneseq
          %v682 = vshrl.u32 %v681, 7
          %v683 = vsub.s32 0, %v682
          %v684 = vrot.slane %v676, %v683
          %v686 = vmul.f32 %v668, %v684
          %v687 = vmul.f32 %v669, %v684
          %v689 = vlaneseq
          %v690 = vshrl.u32 %v689, 7
          %v691 = vsub.s32 0, %v690
          %v692 = vrot.slane %v679, %v691
          %v694 = vadd.f32 %v686, %v692
          %v695 = vadd.f32 %v687, %v692
          %v696 = vmax.f32 %v694, 0.0
          %v697 = vmax.f32 %v695, 0.0
          %v698 = vpack.c.bf16 %v697, %v696
          %v699 = vld [vmem:[#allocation2] sm:$0xf]
          %v700 = vld [vmem:[#allocation2 + $0x4] sm:$0xf]
          %v701 = vld [vmem:[#allocation2 + $0x8] sm:$0xf]
          %v702 = vld [vmem:[#allocation2 + $0xc] sm:$0xf]
          %v707 = vunpack.c.l.b16 %v699
          %v708 = vunpack.c.l.b16 %v700
          %v709 = vunpack.c.l.b16 %v701
          %v710 = vunpack.c.l.b16 %v702
          %v711 = vpack.c.b16 %v708, %v707
          %v712 = vpack.c.b16 %v710, %v709
          %vm715 = vcmask 261120
          %v717 = vsel %vm715, %v698, 0
          %719 = vmatprep.subr.bf16.mxu0 0
          %720 = vmatpush1.bf16.msra.mxu0 0
          %721 = vmatprep.subr.bf16.mxu0 0
          %722 = vmatpush1.bf16.msra.mxu0 0
          %723 = vmatprep.subr.bf16.mxu0 0
          %724 = vmatpush1.bf16.msra.mxu0 0
          %725 = vmatprep.subr.bf16.mxu0 0
          %726 = vmatpush1.bf16.msra.mxu0 0
          %727 = vmatprep.subr.bf16.mxu0 0
          %728 = vmatpush1.bf16.msra.mxu0 0
          %729 = vmatprep.subr.bf16.mxu0 0
          %730 = vmatpush1.bf16.msra.mxu0 0
          %731 = vmatprep.subr.bf16.mxu0 0
          %732 = vmatpush1.bf16.msra.mxu0 %v712
          %733 = vmatprep.subr.bf16.mxu0 0
          %734 = vmatpush1.bf16.msra.mxu0 %v711
          %735 = vmatprep.subr.bf16.mxu0 0
          %736 = vmatpush2.bf16.msra.mxu0 0
          %737 = vmatprep.subr.bf16.mxu0 0
          %738 = vmatpush2.bf16.msra.mxu0 0
          %739 = vmatprep.subr.bf16.mxu0 0
          %740 = vmatpush2.bf16.msra.mxu0 0
          %741 = vmatprep.subr.bf16.mxu0 0
          %742 = vmatpush2.bf16.msra.mxu0 0
          %743 = vmatprep.subr.bf16.mxu0 0
          %744 = vmatpush2.bf16.msra.mxu0 0
          %745 = vmatprep.subr.bf16.mxu0 0
          %746 = vmatpush2.bf16.msra.mxu0 0
          %747 = vmatprep.subr.bf16.mxu0 0
          %748 = vmatpush2.bf16.msra.mxu0 0
          %749 = vmatprep.subr.bf16.mxu0 0
          %750 = vmatpush2.bf16.msra.mxu0 0
          %751 = vmatprep.mubr.bf16.mxu0 0
          %752 = vmatmul.mubr.bf16.gmra.mxu0 %v717
          %v753 = vpop.f32.mrf.mxu0
          %v754 = vadd.f32 0.0, %v753
          %v755 = vpop.f32.mrf.mxu0
          %v756 = vpop.f32.mrf.mxu0
          %v757 = vadd.f32 0.0, %v756
          %v758 = vpop.f32.mrf.mxu0
          %759 = vdwg.mxu0
          %vm760 = vcmask 523264
          %v761 = vsel %vm760, %v754, 0.0
          %v762 = vsel %vm760, %v757, 0.0
          %v763 = vadd.f32 %v761, %v762
          %v764 = vrot.slane %v763, 4
          %v765 = vadd.f32 %v763, %v764
          %v766 = vrot.slane %v765, 2
          %v767 = vadd.f32 %v765, %v766
          %v768 = vrot.slane %v767, 1
          %v769 = vadd.f32 %v767, %v768
          %v770 = vmul.f32 %v769, 0.0625
          %v771 = vsub.f32 %v754, %v770
          %v772 = vsub.f32 %v757, %v770
          %v773 = vmul.f32 %v771, %v771
          %v774 = vmul.f32 %v772, %v772
          %v775 = vsel %vm760, %v773, 0.0
          %v776 = vsel %vm760, %v774, 0.0
          %v777 = vadd.f32 %v775, %v776
          %v778 = vrot.slane %v777, 4
          %v779 = vadd.f32 %v777, %v778
          %v780 = vrot.slane %v779, 2
          %v781 = vadd.f32 %v779, %v780
          %v782 = vrot.slane %v781, 1
          %v783 = vadd.f32 %v781, %v782
          %p784 = scmp.eq.s32.totalorder %s36, 0
          // Predicated region
          $region89: #{tpu_custom_call.1} parent=87 // pred_check
            %p785 = pneg %p784
          $region90: #{tpu_custom_call.1} parent=87 // pred_check_branch
            %787 = sbr.rel (%p785) target = $region92
          $region91: #{tpu_custom_call.1} parent=87 // pred_region
            %vm788 = vcmask 516096
            %789 = vst.msk [vmem:[#allocation6] sm:$0x1] %vm788, %v770
            %790 = vst.msk [vmem:[#allocation6 + $0x1] sm:$0x1] %vm788, %v783
          $region92: #{tpu_custom_call.1} parent=87 // pred_fallthru
            _
          %p791 = scmp.ne.s32.totalorder %s36, 0
          // Predicated region
          $region93: #{tpu_custom_call.1} parent=87 // pred_check
            %p792 = pneg %p791
          $region94: #{tpu_custom_call.1} parent=87 // pred_check_branch
            %794 = sbr.rel (%p792) target = $region96
          $region95: #{tpu_custom_call.1} parent=87 // pred_region
            %s795 = smul.u32 %s36, 16
            %s796 = scvt.s32.f32 %s795
            %s797 = sadd.f32 %s796, 16.0
            %v798 = vstv %s797
            %v799 = vrcp.pop %v798
            %s800 = vtos %v799
            %s801 = smul.f32 16.0, %s800
            %v802 = vld [vmem:[#allocation6] sm:$0x1]
            %v803 = vsub.f32 %v770, %v802
            %v804 = vstv %s801
            %v805 = vmul.f32 %v803, %v804
            %v806 = vadd.f32 %v802, %v805
            %vm807 = vcmask 516096
            %808 = vst.msk [vmem:[#allocation6] sm:$0x1] %vm807, %v806
            %v809 = vld [vmem:[#allocation6 + $0x1] sm:$0x1]
            %v810 = vadd.f32 %v809, %v783
            %v811 = vmul.f32 %v803, %v803
            %s812 = smul.f32 %s796, %s801
            %v813 = vstv %s812
            %v814 = vmul.f32 %v811, %v813
            %v815 = vadd.f32 %v810, %v814
            %816 = vst.msk [vmem:[#allocation6 + $0x1] sm:$0x1] %vm807, %v815
          $region96: #{tpu_custom_call.1} parent=87 // pred_fallthru
            _
        $region88: #{tpu_custom_call.1} parent=67 // pred_fallthru
          _
        %p817 = scmp.eq.s32.totalorder %s35, 2
        // Predicated region
        $region97: #{tpu_custom_call.1} parent=67 // pred_check
          %p818 = pneg %p817
        $region98: #{tpu_custom_call.1} parent=67 // pred_check_branch
          %820 = sbr.rel (%p818) target = $region100
        $region99: #{tpu_custom_call.1} parent=67 // pred_region
          %v821 = vld [vmem:[%s1] sm:$0x7]
          %823 = vset.pattern.permute.xlu0 0
          %824 = vperm.xlu0 %823, %v505
          %v825 = vpop.permute.xlu0 %824
          %828 = vset.pattern.permute.xlu0 0
          %829 = vperm.xlu0 %828, %v506
          %v830 = vpop.permute.xlu0 %829
          %v832 = vlaneseq
          %v833 = vshrl.u32 %v832, 7
          %v834 = vsub.s32 0, %v833
          %v835 = vrot.slane %v821, %v834
          %v836 = vmul.f32 %v825, %v835
          %v837 = vmul.f32 %v830, %v835
          %838 = vset.pattern.permute.xlu0 1
          %839 = vperm.xlu0 %838, %v505
          %v840 = vpop.permute.xlu0 %839
          %842 = vset.pattern.permute.xlu0 1
          %843 = vperm.xlu0 %842, %v506
          %v844 = vpop.permute.xlu0 %843
          %v846 = vlaneseq
          %v847 = vshrl.u32 %v846, 7
          %v848 = vsub.s32 1, %v847
          %v849 = vrot.slane %v821, %v848
          %v850 = vmul.f32 %v840, %v849
          %v851 = vmul.f32 %v844, %v849
          %v852 = vadd.f32 %v836, %v850
          %v853 = vadd.f32 %v837, %v851
          %854 = vset.pattern.permute.xlu0 2
          %855 = vperm.xlu0 %854, %v505
          %v856 = vpop.permute.xlu0 %855
          %858 = vset.pattern.permute.xlu0 2
          %859 = vperm.xlu0 %858, %v506
          %v860 = vpop.permute.xlu0 %859
          %v862 = vlaneseq
          %v863 = vshrl.u32 %v862, 7
          %v864 = vsub.s32 2, %v863
          %v865 = vrot.slane %v821, %v864
          %v866 = vmul.f32 %v856, %v865
          %v867 = vmul.f32 %v860, %v865
          %v868 = vadd.f32 %v852, %v866
          %v869 = vadd.f32 %v853, %v867
          %v870 = vld [vmem:[#allocation5] sm:$0x1]
          %v871 = vld [vmem:[#allocation5 + $0x1] sm:$0x1]
          %v872 = vmul.f32 %v871, 0.03125
          %v873 = vld [vmem:[%s2] sm:$0x1]
          %v874 = vadd.f32 %v872, 1e-05
          %v875 = vrsqrt.pop %v874
          %v876 = vmul.f32 %v873, %v875
          %v877 = vld [vmem:[%s3] sm:$0x1]
          %v878 = vmul.f32 %v870, %v876
          %v879 = vsub.f32 %v877, %v878
          %v881 = vlaneseq
          %v882 = vshrl.u32 %v881, 7
          %v883 = vsub.s32 0, %v882
          %v884 = vrot.slane %v876, %v883
          %v886 = vmul.f32 %v868, %v884
          %v887 = vmul.f32 %v869, %v884
          %v889 = vlaneseq
          %v890 = vshrl.u32 %v889, 7
          %v891 = vsub.s32 0, %v890
          %v892 = vrot.slane %v879, %v891
          %v894 = vadd.f32 %v886, %v892
          %v895 = vadd.f32 %v887, %v892
          %v896 = vmax.f32 %v894, 0.0
          %v897 = vmax.f32 %v895, 0.0
          %v898 = vpack.c.bf16 %v897, %v896
          %v899 = vld [vmem:[#allocation2] sm:$0xf]
          %v900 = vld [vmem:[#allocation2 + $0x4] sm:$0xf]
          %v901 = vld [vmem:[#allocation2 + $0x8] sm:$0xf]
          %v902 = vld [vmem:[#allocation2 + $0xc] sm:$0xf]
          %v907 = vunpack.c.l.b16 %v899
          %v908 = vunpack.c.l.b16 %v900
          %v909 = vunpack.c.l.b16 %v901
          %v910 = vunpack.c.l.b16 %v902
          %v911 = vpack.c.b16 %v908, %v907
          %v912 = vpack.c.b16 %v910, %v909
          %vm915 = vcmask 261120
          %v917 = vsel %vm915, %v898, 0
          %919 = vmatprep.subr.bf16.mxu0 0
          %920 = vmatpush1.bf16.msra.mxu0 0
          %921 = vmatprep.subr.bf16.mxu0 0
          %922 = vmatpush1.bf16.msra.mxu0 0
          %923 = vmatprep.subr.bf16.mxu0 0
          %924 = vmatpush1.bf16.msra.mxu0 0
          %925 = vmatprep.subr.bf16.mxu0 0
          %926 = vmatpush1.bf16.msra.mxu0 0
          %927 = vmatprep.subr.bf16.mxu0 0
          %928 = vmatpush1.bf16.msra.mxu0 0
          %929 = vmatprep.subr.bf16.mxu0 0
          %930 = vmatpush1.bf16.msra.mxu0 0
          %931 = vmatprep.subr.bf16.mxu0 0
          %932 = vmatpush1.bf16.msra.mxu0 %v912
          %933 = vmatprep.subr.bf16.mxu0 0
          %934 = vmatpush1.bf16.msra.mxu0 %v911
          %935 = vmatprep.subr.bf16.mxu0 0
          %936 = vmatpush2.bf16.msra.mxu0 0
          %937 = vmatprep.subr.bf16.mxu0 0
          %938 = vmatpush2.bf16.msra.mxu0 0
          %939 = vmatprep.subr.bf16.mxu0 0
          %940 = vmatpush2.bf16.msra.mxu0 0
          %941 = vmatprep.subr.bf16.mxu0 0
          %942 = vmatpush2.bf16.msra.mxu0 0
          %943 = vmatprep.subr.bf16.mxu0 0
          %944 = vmatpush2.bf16.msra.mxu0 0
          %945 = vmatprep.subr.bf16.mxu0 0
          %946 = vmatpush2.bf16.msra.mxu0 0
          %947 = vmatprep.subr.bf16.mxu0 0
          %948 = vmatpush2.bf16.msra.mxu0 0
          %949 = vmatprep.subr.bf16.mxu0 0
          %950 = vmatpush2.bf16.msra.mxu0 0
          %951 = vmatprep.mubr.bf16.mxu0 0
          %952 = vmatmul.mubr.bf16.gmra.mxu0 %v917
          %v953 = vpop.f32.mrf.mxu0
          %v954 = vadd.f32 0.0, %v953
          %v955 = vpop.f32.mrf.mxu0
          %v956 = vpop.f32.mrf.mxu0
          %v957 = vadd.f32 0.0, %v956
          %v958 = vpop.f32.mrf.mxu0
          %959 = vdwg.mxu0
          %v960 = vld [vmem:[#allocation6] sm:$0x1]
          %v961 = vld [vmem:[#allocation6 + $0x1] sm:$0x1]
          %v962 = vmul.f32 %v961, 0.03125
          %v963 = vld [vmem:[%s5] sm:$0x1]
          %v964 = vadd.f32 %v962, 1e-05
          %v965 = vrsqrt.pop %v964
          %v966 = vmul.f32 %v963, %v965
          %v967 = vld [vmem:[%s6] sm:$0x1]
          %v968 = vmul.f32 %v960, %v966
          %v969 = vsub.f32 %v967, %v968
          %v971 = vlaneseq
          %v972 = vshrl.u32 %v971, 7
          %v973 = vsub.s32 0, %v972
          %v974 = vrot.slane %v966, %v973
          %v976 = vmul.f32 %v954, %v974
          %v977 = vmul.f32 %v957, %v974
          %v979 = vlaneseq
          %v980 = vshrl.u32 %v979, 7
          %v981 = vsub.s32 0, %v980
          %v982 = vrot.slane %v969, %v981
          %v984 = vadd.f32 %v976, %v982
          %v985 = vadd.f32 %v977, %v982
          %v986 = vmax.f32 %v984, 0.0
          %v987 = vmax.f32 %v985, 0.0
          %vm988 = vcmask 523264
          %v989 = vsel %vm988, %v986, -inf
          %v990 = vsel %vm988, %v987, -inf
          %v991 = vmax.f32 %v989, %v990
          %v992 = vrot.slane %v991, 4
          %v993 = vmax.f32 %v991, %v992
          %v994 = vrot.slane %v993, 2
          %v995 = vmax.f32 %v993, %v994
          %v996 = vrot.slane %v995, 1
          %v997 = vmax.f32 %v995, %v996
          %v998 = vpack.c.bf16 %v987, %v986
          %v999 = vld [vmem:[%s7] sm:$0xf]
          %v1000 = vld [vmem:[%s7 + $0x4] sm:$0xf]
          %v1001 = vld [vmem:[%s7 + $0x8] sm:$0xf]
          %v1002 = vld [vmem:[%s7 + $0xc] sm:$0xf]
          %v1003 = vld [vmem:[%s7 + $0x10] sm:$0xf]
          %v1004 = vld [vmem:[%s7 + $0x14] sm:$0xf]
          %v1005 = vld [vmem:[%s7 + $0x18] sm:$0xf]
          %v1006 = vld [vmem:[%s7 + $0x1c] sm:$0xf]
          %v1015 = vunpack.c.l.b16 %v999
          %v1016 = vunpack.c.l.b16 %v1000
          %v1017 = vunpack.c.l.b16 %v1001
          %v1018 = vunpack.c.l.b16 %v1002
          %v1019 = vunpack.c.l.b16 %v1003
          %v1020 = vunpack.c.l.b16 %v1004
          %v1021 = vunpack.c.l.b16 %v1005
          %v1022 = vunpack.c.l.b16 %v1006
          %v1023 = vpack.c.b16 %v1016, %v1015
          %v1024 = vpack.c.b16 %v1018, %v1017
          %v1025 = vpack.c.b16 %v1020, %v1019
          %v1026 = vpack.c.b16 %v1022, %v1021
          %v1032 = vsel %vm988, %v998, 0
          %1034 = vmatprep.subr.bf16.mxu0 0
          %1035 = vmatpush1.bf16.msra.mxu0 0
          %1036 = vmatprep.subr.bf16.mxu0 0
          %1037 = vmatpush1.bf16.msra.mxu0 0
          %1038 = vmatprep.subr.bf16.mxu0 0
          %1039 = vmatpush1.bf16.msra.mxu0 0
          %1040 = vmatprep.subr.bf16.mxu0 0
          %1041 = vmatpush1.bf16.msra.mxu0 0
          %1042 = vmatprep.subr.bf16.mxu0 0
          %1043 = vmatpush1.bf16.msra.mxu0 %v1026
          %1044 = vmatprep.subr.bf16.mxu0 0
          %1045 = vmatpush1.bf16.msra.mxu0 %v1025
          %1046 = vmatprep.subr.bf16.mxu0 0
          %1047 = vmatpush1.bf16.msra.mxu0 %v1024
          %1048 = vmatprep.subr.bf16.mxu0 0
          %1049 = vmatpush1.bf16.msra.mxu0 %v1023
          %1050 = vmatprep.subr.bf16.mxu0 0
          %1051 = vmatpush2.bf16.msra.mxu0 0
          %1052 = vmatprep.subr.bf16.mxu0 0
          %1053 = vmatpush2.bf16.msra.mxu0 0
          %1054 = vmatprep.subr.bf16.mxu0 0
          %1055 = vmatpush2.bf16.msra.mxu0 0
          %1056 = vmatprep.subr.bf16.mxu0 0
          %1057 = vmatpush2.bf16.msra.mxu0 0
          %1058 = vmatprep.subr.bf16.mxu0 0
          %1059 = vmatpush2.bf16.msra.mxu0 0
          %1060 = vmatprep.subr.bf16.mxu0 0
          %1061 = vmatpush2.bf16.msra.mxu0 0
          %1062 = vmatprep.subr.bf16.mxu0 0
          %1063 = vmatpush2.bf16.msra.mxu0 0
          %1064 = vmatprep.subr.bf16.mxu0 0
          %1065 = vmatpush2.bf16.msra.mxu0 0
          %1066 = vmatprep.mubr.bf16.mxu0 0
          %1067 = vmatmul.mubr.bf16.gmra.mxu0 %v1032
          %v1068 = vpop.f32.mrf.mxu0
          %v1069 = vadd.f32 0.0, %v1068
          %v1070 = vpop.f32.mrf.mxu0
          %v1071 = vpop.f32.mrf.mxu0
          %v1072 = vadd.f32 0.0, %v1071
          %v1073 = vpop.f32.mrf.mxu0
          %1074 = vdwg.mxu0
          %v1075 = vpack.c.bf16 %v997, %v997
          %v1076 = vld [vmem:[%s8] sm:$0xf]
          %v1077 = vld [vmem:[%s8 + $0x4] sm:$0xf]
          %v1078 = vld [vmem:[%s8 + $0x8] sm:$0xf]
          %v1079 = vld [vmem:[%s8 + $0xc] sm:$0xf]
          %v1080 = vld [vmem:[%s8 + $0x10] sm:$0xf]
          %v1081 = vld [vmem:[%s8 + $0x14] sm:$0xf]
          %v1082 = vld [vmem:[%s8 + $0x18] sm:$0xf]
          %v1083 = vld [vmem:[%s8 + $0x1c] sm:$0xf]
          %v1092 = vunpack.c.l.b16 %v1076
          %v1093 = vunpack.c.l.b16 %v1077
          %v1094 = vunpack.c.l.b16 %v1078
          %v1095 = vunpack.c.l.b16 %v1079
          %v1096 = vunpack.c.l.b16 %v1080
          %v1097 = vunpack.c.l.b16 %v1081
          %v1098 = vunpack.c.l.b16 %v1082
          %v1099 = vunpack.c.l.b16 %v1083
          %v1100 = vpack.c.b16 %v1093, %v1092
          %v1101 = vpack.c.b16 %v1095, %v1094
          %v1102 = vpack.c.b16 %v1097, %v1096
          %v1103 = vpack.c.b16 %v1099, %v1098
          %v1109 = vsel %vm988, %v1075, 0
          %1111 = vmatprep.subr.bf16.mxu0 0
          %1112 = vmatpush1.bf16.msra.mxu0 0
          %1113 = vmatprep.subr.bf16.mxu0 0
          %1114 = vmatpush1.bf16.msra.mxu0 0
          %1115 = vmatprep.subr.bf16.mxu0 0
          %1116 = vmatpush1.bf16.msra.mxu0 0
          %1117 = vmatprep.subr.bf16.mxu0 0
          %1118 = vmatpush1.bf16.msra.mxu0 0
          %1119 = vmatprep.subr.bf16.mxu0 0
          %1120 = vmatpush1.bf16.msra.mxu0 %v1103
          %1121 = vmatprep.subr.bf16.mxu0 0
          %1122 = vmatpush1.bf16.msra.mxu0 %v1102
          %1123 = vmatprep.subr.bf16.mxu0 0
          %1124 = vmatpush1.bf16.msra.mxu0 %v1101
          %1125 = vmatprep.subr.bf16.mxu0 0
          %1126 = vmatpush1.bf16.msra.mxu0 %v1100
          %1127 = vmatprep.subr.bf16.mxu0 0
          %1128 = vmatpush2.bf16.msra.mxu0 0
          %1129 = vmatprep.subr.bf16.mxu0 0
          %1130 = vmatpush2.bf16.msra.mxu0 0
          %1131 = vmatprep.subr.bf16.mxu0 0
          %1132 = vmatpush2.bf16.msra.mxu0 0
          %1133 = vmatprep.subr.bf16.mxu0 0
          %1134 = vmatpush2.bf16.msra.mxu0 0
          %1135 = vmatprep.subr.bf16.mxu0 0
          %1136 = vmatpush2.bf16.msra.mxu0 0
          %1137 = vmatprep.subr.bf16.mxu0 0
          %1138 = vmatpush2.bf16.msra.mxu0 0
          %1139 = vmatprep.subr.bf16.mxu0 0
          %1140 = vmatpush2.bf16.msra.mxu0 0
          %1141 = vmatprep.subr.bf16.mxu0 0
          %1142 = vmatpush2.bf16.msra.mxu0 0
          %1143 = vmatprep.mubr.bf16.mxu0 0
          %1144 = vmatmul.mubr.bf16.gmra.mxu0 %v1109
          %v1145 = vpop.f32.mrf.mxu0
          %v1146 = vadd.f32 0.0, %v1145
          %v1147 = vpop.f32.mrf.mxu0
          %v1148 = vpop.f32.mrf.mxu0
          %v1149 = vpop.f32.mrf.mxu0
          %1150 = vdwg.mxu0
          %v1151 = vlaneseq
          %v1152 = vshrl.u32 %v1151, 7
          %v1153 = vsub.s32 0, %v1152
          %v1154 = vrot.slane %v1146, %v1153
          %v1155 = vadd.f32 %v1069, %v1154
          %v1156 = vadd.f32 %v1072, %v1154
          %v1157 = vsel %vm988, %v1155, 0.0
          %v1158 = vsel %vm988, %v1156, 0.0
          %v1159 = vadd.f32 %v1157, %v1158
          %v1160 = vrot.slane %v1159, 4
          %v1161 = vadd.f32 %v1159, %v1160
          %v1162 = vrot.slane %v1161, 2
          %v1163 = vadd.f32 %v1161, %v1162
          %v1164 = vrot.slane %v1163, 1
          %v1165 = vadd.f32 %v1163, %v1164
          %v1166 = vmul.f32 %v1165, 0.0625
          %v1167 = vsub.f32 %v1155, %v1166
          %v1168 = vsub.f32 %v1156, %v1166
          %v1169 = vmul.f32 %v1167, %v1167
          %v1170 = vmul.f32 %v1168, %v1168
          %v1171 = vsel %vm988, %v1169, 0.0
          %v1172 = vsel %vm988, %v1170, 0.0
          %v1173 = vadd.f32 %v1171, %v1172
          %v1174 = vrot.slane %v1173, 4
          %v1175 = vadd.f32 %v1173, %v1174
          %v1176 = vrot.slane %v1175, 2
          %v1177 = vadd.f32 %v1175, %v1176
          %v1178 = vrot.slane %v1177, 1
          %v1179 = vadd.f32 %v1177, %v1178
          %p1180 = scmp.eq.s32.totalorder %s36, 0
          // Predicated region
          $region101: #{tpu_custom_call.1} parent=99 // pred_check
            %p1181 = pneg %p1180
          $region102: #{tpu_custom_call.1} parent=99 // pred_check_branch
            %1183 = sbr.rel (%p1181) target = $region104
          $region103: #{tpu_custom_call.1} parent=99 // pred_region
            %vm1184 = vcmask 516096
            %1185 = vst.msk [vmem:[#allocation8] sm:$0x1] %vm1184, %v1166
            %1186 = vst.msk [vmem:[#allocation8 + $0x1] sm:$0x1] %vm1184, %v1179
          $region104: #{tpu_custom_call.1} parent=99 // pred_fallthru
            _
          %p1187 = scmp.ne.s32.totalorder %s36, 0
          // Predicated region
          $region105: #{tpu_custom_call.1} parent=99 // pred_check
            %p1188 = pneg %p1187
          $region106: #{tpu_custom_call.1} parent=99 // pred_check_branch
            %1190 = sbr.rel (%p1188) target = $region108
          $region107: #{tpu_custom_call.1} parent=99 // pred_region
            %s1191 = smul.u32 %s36, 16
            %s1192 = scvt.s32.f32 %s1191
            %s1193 = sadd.f32 %s1192, 16.0
            %v1194 = vstv %s1193
            %v1195 = vrcp.pop %v1194
            %s1196 = vtos %v1195
            %s1197 = smul.f32 16.0, %s1196
            %v1198 = vld [vmem:[#allocation8] sm:$0x1]
            %v1199 = vsub.f32 %v1166, %v1198
            %v1200 = vstv %s1197
            %v1201 = vmul.f32 %v1199, %v1200
            %v1202 = vadd.f32 %v1198, %v1201
            %vm1203 = vcmask 516096
            %1204 = vst.msk [vmem:[#allocation8] sm:$0x1] %vm1203, %v1202
            %v1205 = vld [vmem:[#allocation8 + $0x1] sm:$0x1]
            %v1206 = vadd.f32 %v1205, %v1179
            %v1207 = vmul.f32 %v1199, %v1199
            %s1208 = smul.f32 %s1192, %s1197
            %v1209 = vstv %s1208
            %v1210 = vmul.f32 %v1207, %v1209
            %v1211 = vadd.f32 %v1206, %v1210
            %1212 = vst.msk [vmem:[#allocation8 + $0x1] sm:$0x1] %vm1203, %v1211
          $region108: #{tpu_custom_call.1} parent=99 // pred_fallthru
            _
        $region100: #{tpu_custom_call.1} parent=67 // pred_fallthru
          _
        %p1213 = scmp.eq.s32.totalorder %s35, 3
        // Predicated region
        $region109: #{tpu_custom_call.1} parent=67 // pred_check
          %p1214 = pneg %p1213
        $region110: #{tpu_custom_call.1} parent=67 // pred_check_branch
          %1216 = sbr.rel (%p1214) target = $region112
        $region111: #{tpu_custom_call.1} parent=67 // pred_region
          %v1217 = vld [vmem:[%s1] sm:$0x7]
          %1219 = vset.pattern.permute.xlu0 0
          %1220 = vperm.xlu0 %1219, %v505
          %v1221 = vpop.permute.xlu0 %1220
          %1224 = vset.pattern.permute.xlu0 0
          %1225 = vperm.xlu0 %1224, %v506
          %v1226 = vpop.permute.xlu0 %1225
          %v1228 = vlaneseq
          %v1229 = vshrl.u32 %v1228, 7
          %v1230 = vsub.s32 0, %v1229
          %v1231 = vrot.slane %v1217, %v1230
          %v1232 = vmul.f32 %v1221, %v1231
          %v1233 = vmul.f32 %v1226, %v1231
          %1234 = vset.pattern.permute.xlu0 1
          %1235 = vperm.xlu0 %1234, %v505
          %v1236 = vpop.permute.xlu0 %1235
          %1238 = vset.pattern.permute.xlu0 1
          %1239 = vperm.xlu0 %1238, %v506
          %v1240 = vpop.permute.xlu0 %1239
          %v1242 = vlaneseq
          %v1243 = vshrl.u32 %v1242, 7
          %v1244 = vsub.s32 1, %v1243
          %v1245 = vrot.slane %v1217, %v1244
          %v1246 = vmul.f32 %v1236, %v1245
          %v1247 = vmul.f32 %v1240, %v1245
          %v1248 = vadd.f32 %v1232, %v1246
          %v1249 = vadd.f32 %v1233, %v1247
          %1250 = vset.pattern.permute.xlu0 2
          %1251 = vperm.xlu0 %1250, %v505
          %v1252 = vpop.permute.xlu0 %1251
          %1254 = vset.pattern.permute.xlu0 2
          %1255 = vperm.xlu0 %1254, %v506
          %v1256 = vpop.permute.xlu0 %1255
          %v1258 = vlaneseq
          %v1259 = vshrl.u32 %v1258, 7
          %v1260 = vsub.s32 2, %v1259
          %v1261 = vrot.slane %v1217, %v1260
          %v1262 = vmul.f32 %v1252, %v1261
          %v1263 = vmul.f32 %v1256, %v1261
          %v1264 = vadd.f32 %v1248, %v1262
          %v1265 = vadd.f32 %v1249, %v1263
          %v1266 = vld [vmem:[#allocation5] sm:$0x1]
          %v1267 = vld [vmem:[#allocation5 + $0x1] sm:$0x1]
          %v1268 = vmul.f32 %v1267, 0.03125
          %v1269 = vld [vmem:[%s2] sm:$0x1]
          %v1270 = vadd.f32 %v1268, 1e-05
          %v1271 = vrsqrt.pop %v1270
          %v1272 = vmul.f32 %v1269, %v1271
          %v1273 = vld [vmem:[%s3] sm:$0x1]
          %v1274 = vmul.f32 %v1266, %v1272
          %v1275 = vsub.f32 %v1273, %v1274
          %v1277 = vlaneseq
          %v1278 = vshrl.u32 %v1277, 7
          %v1279 = vsub.s32 0, %v1278
          %v1280 = vrot.slane %v1272, %v1279
          %v1282 = vmul.f32 %v1264, %v1280
          %v1283 = vmul.f32 %v1265, %v1280
          %v1285 = vlaneseq
          %v1286 = vshrl.u32 %v1285, 7
          %v1287 = vsub.s32 0, %v1286
          %v1288 = vrot.slane %v1275, %v1287
          %v1290 = vadd.f32 %v1282, %v1288
          %v1291 = vadd.f32 %v1283, %v1288
          %v1292 = vmax.f32 %v1290, 0.0
          %v1293 = vmax.f32 %v1291, 0.0
          %v1294 = vpack.c.bf16 %v1293, %v1292
          %v1295 = vld [vmem:[#allocation2] sm:$0xf]
          %v1296 = vld [vmem:[#allocation2 + $0x4] sm:$0xf]
          %v1297 = vld [vmem:[#allocation2 + $0x8] sm:$0xf]
          %v1298 = vld [vmem:[#allocation2 + $0xc] sm:$0xf]
          %v1303 = vunpack.c.l.b16 %v1295
          %v1304 = vunpack.c.l.b16 %v1296
          %v1305 = vunpack.c.l.b16 %v1297
          %v1306 = vunpack.c.l.b16 %v1298
          %v1307 = vpack.c.b16 %v1304, %v1303
          %v1308 = vpack.c.b16 %v1306, %v1305
          %vm1311 = vcmask 261120
          %v1313 = vsel %vm1311, %v1294, 0
          %1315 = vmatprep.subr.bf16.mxu0 0
          %1316 = vmatpush1.bf16.msra.mxu0 0
          %1317 = vmatprep.subr.bf16.mxu0 0
          %1318 = vmatpush1.bf16.msra.mxu0 0
          %1319 = vmatprep.subr.bf16.mxu0 0
          %1320 = vmatpush1.bf16.msra.mxu0 0
          %1321 = vmatprep.subr.bf16.mxu0 0
          %1322 = vmatpush1.bf16.msra.mxu0 0
          %1323 = vmatprep.subr.bf16.mxu0 0
          %1324 = vmatpush1.bf16.msra.mxu0 0
          %1325 = vmatprep.subr.bf16.mxu0 0
          %1326 = vmatpush1.bf16.msra.mxu0 0
          %1327 = vmatprep.subr.bf16.mxu0 0
          %1328 = vmatpush1.bf16.msra.mxu0 %v1308
          %1329 = vmatprep.subr.bf16.mxu0 0
          %1330 = vmatpush1.bf16.msra.mxu0 %v1307
          %1331 = vmatprep.subr.bf16.mxu0 0
          %1332 = vmatpush2.bf16.msra.mxu0 0
          %1333 = vmatprep.subr.bf16.mxu0 0
          %1334 = vmatpush2.bf16.msra.mxu0 0
          %1335 = vmatprep.subr.bf16.mxu0 0
          %1336 = vmatpush2.bf16.msra.mxu0 0
          %1337 = vmatprep.subr.bf16.mxu0 0
          %1338 = vmatpush2.bf16.msra.mxu0 0
          %1339 = vmatprep.subr.bf16.mxu0 0
          %1340 = vmatpush2.bf16.msra.mxu0 0
          %1341 = vmatprep.subr.bf16.mxu0 0
          %1342 = vmatpush2.bf16.msra.mxu0 0
          %1343 = vmatprep.subr.bf16.mxu0 0
          %1344 = vmatpush2.bf16.msra.mxu0 0
          %1345 = vmatprep.subr.bf16.mxu0 0
          %1346 = vmatpush2.bf16.msra.mxu0 0
          %1347 = vmatprep.mubr.bf16.mxu0 0
          %1348 = vmatmul.mubr.bf16.gmra.mxu0 %v1313
          %v1349 = vpop.f32.mrf.mxu0
          %v1350 = vadd.f32 0.0, %v1349
          %v1351 = vpop.f32.mrf.mxu0
          %v1352 = vpop.f32.mrf.mxu0
          %v1353 = vadd.f32 0.0, %v1352
          %v1354 = vpop.f32.mrf.mxu0
          %1355 = vdwg.mxu0
          %v1356 = vld [vmem:[#allocation6] sm:$0x1]
          %v1357 = vld [vmem:[#allocation6 + $0x1] sm:$0x1]
          %v1358 = vmul.f32 %v1357, 0.03125
          %v1359 = vld [vmem:[%s5] sm:$0x1]
          %v1360 = vadd.f32 %v1358, 1e-05
          %v1361 = vrsqrt.pop %v1360
          %v1362 = vmul.f32 %v1359, %v1361
          %v1363 = vld [vmem:[%s6] sm:$0x1]
          %v1364 = vmul.f32 %v1356, %v1362
          %v1365 = vsub.f32 %v1363, %v1364
          %v1367 = vlaneseq
          %v1368 = vshrl.u32 %v1367, 7
          %v1369 = vsub.s32 0, %v1368
          %v1370 = vrot.slane %v1362, %v1369
          %v1372 = vmul.f32 %v1350, %v1370
          %v1373 = vmul.f32 %v1353, %v1370
          %v1375 = vlaneseq
          %v1376 = vshrl.u32 %v1375, 7
          %v1377 = vsub.s32 0, %v1376
          %v1378 = vrot.slane %v1365, %v1377
          %v1380 = vadd.f32 %v1372, %v1378
          %v1381 = vadd.f32 %v1373, %v1378
          %v1382 = vmax.f32 %v1380, 0.0
          %v1383 = vmax.f32 %v1381, 0.0
          %vm1384 = vcmask 523264
          %v1385 = vsel %vm1384, %v1382, -inf
          %v1386 = vsel %vm1384, %v1383, -inf
          %v1387 = vmax.f32 %v1385, %v1386
          %v1388 = vrot.slane %v1387, 4
          %v1389 = vmax.f32 %v1387, %v1388
          %v1390 = vrot.slane %v1389, 2
          %v1391 = vmax.f32 %v1389, %v1390
          %v1392 = vrot.slane %v1391, 1
          %v1393 = vmax.f32 %v1391, %v1392
          %v1394 = vpack.c.bf16 %v1383, %v1382
          %v1395 = vld [vmem:[%s7] sm:$0xf]
          %v1396 = vld [vmem:[%s7 + $0x4] sm:$0xf]
          %v1397 = vld [vmem:[%s7 + $0x8] sm:$0xf]
          %v1398 = vld [vmem:[%s7 + $0xc] sm:$0xf]
          %v1399 = vld [vmem:[%s7 + $0x10] sm:$0xf]
          %v1400 = vld [vmem:[%s7 + $0x14] sm:$0xf]
          %v1401 = vld [vmem:[%s7 + $0x18] sm:$0xf]
          %v1402 = vld [vmem:[%s7 + $0x1c] sm:$0xf]
          %v1411 = vunpack.c.l.b16 %v1395
          %v1412 = vunpack.c.l.b16 %v1396
          %v1413 = vunpack.c.l.b16 %v1397
          %v1414 = vunpack.c.l.b16 %v1398
          %v1415 = vunpack.c.l.b16 %v1399
          %v1416 = vunpack.c.l.b16 %v1400
          %v1417 = vunpack.c.l.b16 %v1401
          %v1418 = vunpack.c.l.b16 %v1402
          %v1419 = vpack.c.b16 %v1412, %v1411
          %v1420 = vpack.c.b16 %v1414, %v1413
          %v1421 = vpack.c.b16 %v1416, %v1415
          %v1422 = vpack.c.b16 %v1418, %v1417
          %v1428 = vsel %vm1384, %v1394, 0
          %1430 = vmatprep.subr.bf16.mxu0 0
          %1431 = vmatpush1.bf16.msra.mxu0 0
          %1432 = vmatprep.subr.bf16.mxu0 0
          %1433 = vmatpush1.bf16.msra.mxu0 0
          %1434 = vmatprep.subr.bf16.mxu0 0
          %1435 = vmatpush1.bf16.msra.mxu0 0
          %1436 = vmatprep.subr.bf16.mxu0 0
          %1437 = vmatpush1.bf16.msra.mxu0 0
          %1438 = vmatprep.subr.bf16.mxu0 0
          %1439 = vmatpush1.bf16.msra.mxu0 %v1422
          %1440 = vmatprep.subr.bf16.mxu0 0
          %1441 = vmatpush1.bf16.msra.mxu0 %v1421
          %1442 = vmatprep.subr.bf16.mxu0 0
          %1443 = vmatpush1.bf16.msra.mxu0 %v1420
          %1444 = vmatprep.subr.bf16.mxu0 0
          %1445 = vmatpush1.bf16.msra.mxu0 %v1419
          %1446 = vmatprep.subr.bf16.mxu0 0
          %1447 = vmatpush2.bf16.msra.mxu0 0
          %1448 = vmatprep.subr.bf16.mxu0 0
          %1449 = vmatpush2.bf16.msra.mxu0 0
          %1450 = vmatprep.subr.bf16.mxu0 0
          %1451 = vmatpush2.bf16.msra.mxu0 0
          %1452 = vmatprep.subr.bf16.mxu0 0
          %1453 = vmatpush2.bf16.msra.mxu0 0
          %1454 = vmatprep.subr.bf16.mxu0 0
          %1455 = vmatpush2.bf16.msra.mxu0 0
          %1456 = vmatprep.subr.bf16.mxu0 0
          %1457 = vmatpush2.bf16.msra.mxu0 0
          %1458 = vmatprep.subr.bf16.mxu0 0
          %1459 = vmatpush2.bf16.msra.mxu0 0
          %1460 = vmatprep.subr.bf16.mxu0 0
          %1461 = vmatpush2.bf16.msra.mxu0 0
          %1462 = vmatprep.mubr.bf16.mxu0 0
          %1463 = vmatmul.mubr.bf16.gmra.mxu0 %v1428
          %v1464 = vpop.f32.mrf.mxu0
          %v1465 = vadd.f32 0.0, %v1464
          %v1466 = vpop.f32.mrf.mxu0
          %v1467 = vpop.f32.mrf.mxu0
          %v1468 = vadd.f32 0.0, %v1467
          %v1469 = vpop.f32.mrf.mxu0
          %1470 = vdwg.mxu0
          %v1471 = vpack.c.bf16 %v1393, %v1393
          %v1472 = vld [vmem:[%s8] sm:$0xf]
          %v1473 = vld [vmem:[%s8 + $0x4] sm:$0xf]
          %v1474 = vld [vmem:[%s8 + $0x8] sm:$0xf]
          %v1475 = vld [vmem:[%s8 + $0xc] sm:$0xf]
          %v1476 = vld [vmem:[%s8 + $0x10] sm:$0xf]
          %v1477 = vld [vmem:[%s8 + $0x14] sm:$0xf]
          %v1478 = vld [vmem:[%s8 + $0x18] sm:$0xf]
          %v1479 = vld [vmem:[%s8 + $0x1c] sm:$0xf]
          %v1488 = vunpack.c.l.b16 %v1472
          %v1489 = vunpack.c.l.b16 %v1473
          %v1490 = vunpack.c.l.b16 %v1474
          %v1491 = vunpack.c.l.b16 %v1475
          %v1492 = vunpack.c.l.b16 %v1476
          %v1493 = vunpack.c.l.b16 %v1477
          %v1494 = vunpack.c.l.b16 %v1478
          %v1495 = vunpack.c.l.b16 %v1479
          %v1496 = vpack.c.b16 %v1489, %v1488
          %v1497 = vpack.c.b16 %v1491, %v1490
          %v1498 = vpack.c.b16 %v1493, %v1492
          %v1499 = vpack.c.b16 %v1495, %v1494
          %v1505 = vsel %vm1384, %v1471, 0
          %1507 = vmatprep.subr.bf16.mxu0 0
          %1508 = vmatpush1.bf16.msra.mxu0 0
          %1509 = vmatprep.subr.bf16.mxu0 0
          %1510 = vmatpush1.bf16.msra.mxu0 0
          %1511 = vmatprep.subr.bf16.mxu0 0
          %1512 = vmatpush1.bf16.msra.mxu0 0
          %1513 = vmatprep.subr.bf16.mxu0 0
          %1514 = vmatpush1.bf16.msra.mxu0 0
          %1515 = vmatprep.subr.bf16.mxu0 0
          %1516 = vmatpush1.bf16.msra.mxu0 %v1499
          %1517 = vmatprep.subr.bf16.mxu0 0
          %1518 = vmatpush1.bf16.msra.mxu0 %v1498
          %1519 = vmatprep.subr.bf16.mxu0 0
          %1520 = vmatpush1.bf16.msra.mxu0 %v1497
          %1521 = vmatprep.subr.bf16.mxu0 0
          %1522 = vmatpush1.bf16.msra.mxu0 %v1496
          %1523 = vmatprep.subr.bf16.mxu0 0
          %1524 = vmatpush2.bf16.msra.mxu0 0
          %1525 = vmatprep.subr.bf16.mxu0 0
          %1526 = vmatpush2.bf16.msra.mxu0 0
          %1527 = vmatprep.subr.bf16.mxu0 0
          %1528 = vmatpush2.bf16.msra.mxu0 0
          %1529 = vmatprep.subr.bf16.mxu0 0
          %1530 = vmatpush2.bf16.msra.mxu0 0
          %1531 = vmatprep.subr.bf16.mxu0 0
          %1532 = vmatpush2.bf16.msra.mxu0 0
          %1533 = vmatprep.subr.bf16.mxu0 0
          %1534 = vmatpush2.bf16.msra.mxu0 0
          %1535 = vmatprep.subr.bf16.mxu0 0
          %1536 = vmatpush2.bf16.msra.mxu0 0
          %1537 = vmatprep.subr.bf16.mxu0 0
          %1538 = vmatpush2.bf16.msra.mxu0 0
          %1539 = vmatprep.mubr.bf16.mxu0 0
          %1540 = vmatmul.mubr.bf16.gmra.mxu0 %v1505
          %v1541 = vpop.f32.mrf.mxu0
          %v1542 = vadd.f32 0.0, %v1541
          %v1543 = vpop.f32.mrf.mxu0
          %v1544 = vpop.f32.mrf.mxu0
          %v1545 = vpop.f32.mrf.mxu0
          %1546 = vdwg.mxu0
          %v1547 = vlaneseq
          %v1548 = vshrl.u32 %v1547, 7
          %v1549 = vsub.s32 0, %v1548
          %v1550 = vrot.slane %v1542, %v1549
          %v1551 = vadd.f32 %v1465, %v1550
          %v1552 = vadd.f32 %v1468, %v1550
          %v1553 = vld [vmem:[#allocation8] sm:$0x1]
          %v1554 = vld [vmem:[#allocation8 + $0x1] sm:$0x1]
          %v1555 = vmul.f32 %v1554, 0.03125
          %v1556 = vld [vmem:[%s9] sm:$0x1]
          %v1557 = vadd.f32 %v1555, 1e-05
          %v1558 = vrsqrt.pop %v1557
          %v1559 = vmul.f32 %v1556, %v1558
          %v1560 = vld [vmem:[%s10] sm:$0x1]
          %v1561 = vmul.f32 %v1553, %v1559
          %v1562 = vsub.f32 %v1560, %v1561
          %v1564 = vlaneseq
          %v1565 = vshrl.u32 %v1564, 7
          %v1566 = vsub.s32 0, %v1565
          %v1567 = vrot.slane %v1559, %v1566
          %v1569 = vmul.f32 %v1551, %v1567
          %v1570 = vmul.f32 %v1552, %v1567
          %v1572 = vlaneseq
          %v1573 = vshrl.u32 %v1572, 7
          %v1574 = vsub.s32 0, %v1573
          %v1575 = vrot.slane %v1562, %v1574
          %v1577 = vadd.f32 %v1569, %v1575
          %v1578 = vadd.f32 %v1570, %v1575
          %v1579 = vmax.f32 %v1577, 0.0
          %v1580 = vmax.f32 %v1578, 0.0
          %v1581 = vpack.c.bf16 %v1580, %v1579
          %v1582 = vld [vmem:[%s11] sm:$0xf]
          %v1583 = vld [vmem:[%s11 + $0x4] sm:$0xf]
          %v1584 = vld [vmem:[%s11 + $0x8] sm:$0xf]
          %v1585 = vld [vmem:[%s11 + $0xc] sm:$0xf]
          %v1586 = vld [vmem:[%s11 + $0x10] sm:$0xf]
          %v1587 = vld [vmem:[%s11 + $0x14] sm:$0xf]
          %v1588 = vld [vmem:[%s11 + $0x18] sm:$0xf]
          %v1589 = vld [vmem:[%s11 + $0x1c] sm:$0xf]
          %v1598 = vunpack.c.l.b16 %v1582
          %v1599 = vunpack.c.l.b16 %v1583
          %v1600 = vunpack.c.l.b16 %v1584
          %v1601 = vunpack.c.l.b16 %v1585
          %v1602 = vunpack.c.l.b16 %v1586
          %v1603 = vunpack.c.l.b16 %v1587
          %v1604 = vunpack.c.l.b16 %v1588
          %v1605 = vunpack.c.l.b16 %v1589
          %v1606 = vpack.c.b16 %v1599, %v1598
          %v1607 = vpack.c.b16 %v1601, %v1600
          %v1608 = vpack.c.b16 %v1603, %v1602
          %v1609 = vpack.c.b16 %v1605, %v1604
          %v1615 = vsel %vm1384, %v1581, 0
          %1617 = vmatprep.subr.bf16.mxu0 0
          %1618 = vmatpush1.bf16.msra.mxu0 0
          %1619 = vmatprep.subr.bf16.mxu0 0
          %1620 = vmatpush1.bf16.msra.mxu0 0
          %1621 = vmatprep.subr.bf16.mxu0 0
          %1622 = vmatpush1.bf16.msra.mxu0 0
          %1623 = vmatprep.subr.bf16.mxu0 0
          %1624 = vmatpush1.bf16.msra.mxu0 0
          %1625 = vmatprep.subr.bf16.mxu0 0
          %1626 = vmatpush1.bf16.msra.mxu0 %v1609
          %1627 = vmatprep.subr.bf16.mxu0 0
          %1628 = vmatpush1.bf16.msra.mxu0 %v1608
          %1629 = vmatprep.subr.bf16.mxu0 0
          %1630 = vmatpush1.bf16.msra.mxu0 %v1607
          %1631 = vmatprep.subr.bf16.mxu0 0
          %1632 = vmatpush1.bf16.msra.mxu0 %v1606
          %1633 = vmatprep.subr.bf16.mxu0 0
          %1634 = vmatpush2.bf16.msra.mxu0 0
          %1635 = vmatprep.subr.bf16.mxu0 0
          %1636 = vmatpush2.bf16.msra.mxu0 0
          %1637 = vmatprep.subr.bf16.mxu0 0
          %1638 = vmatpush2.bf16.msra.mxu0 0
          %1639 = vmatprep.subr.bf16.mxu0 0
          %1640 = vmatpush2.bf16.msra.mxu0 0
          %1641 = vmatprep.subr.bf16.mxu0 0
          %1642 = vmatpush2.bf16.msra.mxu0 0
          %1643 = vmatprep.subr.bf16.mxu0 0
          %1644 = vmatpush2.bf16.msra.mxu0 0
          %1645 = vmatprep.subr.bf16.mxu0 0
          %1646 = vmatpush2.bf16.msra.mxu0 0
          %1647 = vmatprep.subr.bf16.mxu0 0
          %1648 = vmatpush2.bf16.msra.mxu0 0
          %1649 = vmatprep.mubr.bf16.mxu0 0
          %1650 = vmatmul.mubr.bf16.gmra.mxu0 %v1615
          %v1651 = vpop.f32.mrf.mxu0
          %v1652 = vadd.f32 0.0, %v1651
          %v1653 = vpop.f32.mrf.mxu0
          %v1654 = vpop.f32.mrf.mxu0
          %v1655 = vadd.f32 0.0, %v1654
          %v1656 = vpop.f32.mrf.mxu0
          %1657 = vdwg.mxu0
          %v1658 = vsel %vm1311, %v1652, 0.0
          %v1659 = vsel %vm1311, %v1655, 0.0
          %v1660 = vadd.f32 %v1658, %v1659
          %v1661 = vrot.slane %v1660, 4
          %v1662 = vadd.f32 %v1660, %v1661
          %v1663 = vrot.slane %v1662, 2
          %v1664 = vadd.f32 %v1662, %v1663
          %v1665 = vrot.slane %v1664, 1
          %v1666 = vadd.f32 %v1664, %v1665
          %v1667 = vmul.f32 %v1666, 0.0625
          %v1668 = vsub.f32 %v1652, %v1667
          %v1669 = vsub.f32 %v1655, %v1667
          %v1670 = vmul.f32 %v1668, %v1668
          %v1671 = vmul.f32 %v1669, %v1669
          %v1672 = vsel %vm1311, %v1670, 0.0
          %v1673 = vsel %vm1311, %v1671, 0.0
          %v1674 = vadd.f32 %v1672, %v1673
          %v1675 = vrot.slane %v1674, 4
          %v1676 = vadd.f32 %v1674, %v1675
          %v1677 = vrot.slane %v1676, 2
          %v1678 = vadd.f32 %v1676, %v1677
          %v1679 = vrot.slane %v1678, 1
          %v1680 = vadd.f32 %v1678, %v1679
          %p1681 = scmp.eq.s32.totalorder %s36, 0
          // Predicated region
          $region113: #{tpu_custom_call.1} parent=111 // pred_check
            %p1682 = pneg %p1681
          $region114: #{tpu_custom_call.1} parent=111 // pred_check_branch
            %1684 = sbr.rel (%p1682) target = $region116
          $region115: #{tpu_custom_call.1} parent=111 // pred_region
            %vm1685 = vcmask 253952
            %1686 = vst.msk [vmem:[#allocation9] sm:$0x1] %vm1685, %v1667
            %1687 = vst.msk [vmem:[#allocation9 + $0x1] sm:$0x1] %vm1685, %v1680
          $region116: #{tpu_custom_call.1} parent=111 // pred_fallthru
            _
          %p1688 = scmp.ne.s32.totalorder %s36, 0
          // Predicated region
          $region117: #{tpu_custom_call.1} parent=111 // pred_check
            %p1689 = pneg %p1688
          $region118: #{tpu_custom_call.1} parent=111 // pred_check_branch
            %1691 = sbr.rel (%p1689) target = $region120
          $region119: #{tpu_custom_call.1} parent=111 // pred_region
            %s1692 = smul.u32 %s36, 16
            %s1693 = scvt.s32.f32 %s1692
            %s1694 = sadd.f32 %s1693, 16.0
            %v1695 = vstv %s1694
            %v1696 = vrcp.pop %v1695
            %s1697 = vtos %v1696
            %s1698 = smul.f32 16.0, %s1697
            %v1699 = vld [vmem:[#allocation9] sm:$0x1]
            %v1700 = vsub.f32 %v1667, %v1699
            %v1701 = vstv %s1698
            %v1702 = vmul.f32 %v1700, %v1701
            %v1703 = vadd.f32 %v1699, %v1702
            %vm1704 = vcmask 253952
            %1705 = vst.msk [vmem:[#allocation9] sm:$0x1] %vm1704, %v1703
            %v1706 = vld [vmem:[#allocation9 + $0x1] sm:$0x1]
            %v1707 = vadd.f32 %v1706, %v1680
            %v1708 = vmul.f32 %v1700, %v1700
            %s1709 = smul.f32 %s1693, %s1698
            %v1710 = vstv %s1709
            %v1711 = vmul.f32 %v1708, %v1710
            %v1712 = vadd.f32 %v1707, %v1711
            %1713 = vst.msk [vmem:[#allocation9 + $0x1] sm:$0x1] %vm1704, %v1712
          $region120: #{tpu_custom_call.1} parent=111 // pred_fallthru
            _
        $region112: #{tpu_custom_call.1} parent=67 // pred_fallthru
          _
        // Predicated region
        $region121: #{tpu_custom_call.1} parent=67 // pred_check
          %p1714 = pneg %p313
        $region122: #{tpu_custom_call.1} parent=67 // pred_check_branch
          %1716 = sbr.rel (%p1714) target = $region124
        $region123: #{tpu_custom_call.1} parent=67 // pred_region
          %s1718 = ssub.s32 32, 32
          %1719 = vsyncadd [#allocation4], %s1718
          %s1721 = sshll.u32 [#allocation5], 4
          %s1722 = int_to_ptr.vmem [resolvable:$true] %s1721
          %1724 = dma.vmem_to_hbm [thread:$0]  %s1722, 32, %s12, [#allocation4]
        $region124: #{tpu_custom_call.1} parent=67 // pred_fallthru
          _
        // Predicated region
        $region125: #{tpu_custom_call.1} parent=67 // pred_check
          %p1725 = pneg %p334
        $region126: #{tpu_custom_call.1} parent=67 // pred_check_branch
          %1727 = sbr.rel (%p1725) target = $region128
        $region127: #{tpu_custom_call.1} parent=67 // pred_region
          %s1729 = ssub.s32 32, 32
          %1730 = vsyncadd [#allocation7], %s1729
          %s1732 = sshll.u32 [#allocation6], 4
          %s1733 = int_to_ptr.vmem [resolvable:$true] %s1732
          %1735 = dma.vmem_to_hbm [thread:$0]  %s1733, 32, %s13, [#allocation7]
        $region128: #{tpu_custom_call.1} parent=67 // pred_fallthru
          _
        // Predicated region
        $region129: #{tpu_custom_call.1} parent=67 // pred_check
          %p1736 = pneg %p355
        $region130: #{tpu_custom_call.1} parent=67 // pred_check_branch
          %1738 = sbr.rel (%p1736) target = $region132
        $region131: #{tpu_custom_call.1} parent=67 // pred_region
          %s1740 = ssub.s32 32, 32
          %1741 = vsyncadd [#allocation7], %s1740
          %s1743 = sshll.u32 [#allocation8], 4
          %s1744 = int_to_ptr.vmem [resolvable:$true] %s1743
          %1746 = dma.vmem_to_hbm [thread:$0]  %s1744, 32, %s14, [#allocation7]
        $region132: #{tpu_custom_call.1} parent=67 // pred_fallthru
          _
        // Predicated region
        $region133: #{tpu_custom_call.1} parent=67 // pred_check
          %p1747 = pneg %p376
        $region134: #{tpu_custom_call.1} parent=67 // pred_check_branch
          %1749 = sbr.rel (%p1747) target = $region136
        $region135: #{tpu_custom_call.1} parent=67 // pred_region
          %s1751 = ssub.s32 32, 32
          %1752 = vsyncadd [#allocation10], %s1751
          %s1754 = sshll.u32 [#allocation9], 4
          %s1755 = int_to_ptr.vmem [resolvable:$true] %s1754
          %1757 = dma.vmem_to_hbm [thread:$0]  %s1755, 32, %s15, [#allocation10]
        $region136: #{tpu_custom_call.1} parent=67 // pred_fallthru
          _
        // Predicated region
        $region137: #{tpu_custom_call.1} parent=67 // pred_check
          %p1758 = pneg %p313
        $region138: #{tpu_custom_call.1} parent=67 // pred_check_branch
          %1760 = sbr.rel (%p1758) target = $region140
        $region139: #{tpu_custom_call.1} parent=67 // pred_region
          %1761 = dma.done [#allocation4], 32
        $region140: #{tpu_custom_call.1} parent=67 // pred_fallthru
          _
        // Predicated region
        $region141: #{tpu_custom_call.1} parent=67 // pred_check
          %p1762 = pneg %p334
        $region142: #{tpu_custom_call.1} parent=67 // pred_check_branch
          %1764 = sbr.rel (%p1762) target = $region144
        $region143: #{tpu_custom_call.1} parent=67 // pred_region
          %1765 = dma.done [#allocation7], 32
        $region144: #{tpu_custom_call.1} parent=67 // pred_fallthru
          _
        // Predicated region
        $region145: #{tpu_custom_call.1} parent=67 // pred_check
          %p1766 = pneg %p355
        $region146: #{tpu_custom_call.1} parent=67 // pred_check_branch
          %1768 = sbr.rel (%p1766) target = $region148
        $region147: #{tpu_custom_call.1} parent=67 // pred_region
          %1769 = dma.done [#allocation7], 32
        $region148: #{tpu_custom_call.1} parent=67 // pred_fallthru
          _
        // Predicated region
        $region149: #{tpu_custom_call.1} parent=67 // pred_check
          %p1770 = pneg %p376
        $region150: #{tpu_custom_call.1} parent=67 // pred_check_branch
          %1772 = sbr.rel (%p1770) target = $region152
        $region151: #{tpu_custom_call.1} parent=67 // pred_region
          %1773 = dma.done [#allocation10], 32
        $region152: #{tpu_custom_call.1} parent=67 // pred_fallthru
          _
      $region68: #{tpu_custom_call.1} parent=5 // pred_fallthru
        _
      %p1774 = scmp.le.s32.totalorder 2, %s26
      // Predicated region
      $region153: #{tpu_custom_call.1} parent=5 // pred_check
        %p1775 = pneg %p1774
      $region154: #{tpu_custom_call.1} parent=5 // pred_check_branch
        %1777 = sbr.rel (%p1775) target = $region156
      $region155: #{tpu_custom_call.1} parent=5 // pred_region
        %s1778 = ssub.s32 %s26, 2
      $region156: #{tpu_custom_call.1} parent=5 // pred_fallthru
        _
    $region6: #{tpu_custom_call.1} parent=1 // loop_footer
      %s30 = sadd.s32 1, %s26
    $region7: #{tpu_custom_call.1} parent=1 // loop_footer_branch
      %25 = sbr.rel target = $region3
    $region8: #{tpu_custom_call.1} parent=1 // loop_exit
      _
    %1779 = vsyncpa [#allocation3], 1
    %s1780 = scalar_lea.sflag [#allocation3], 1
    %1781 = vsyncpa %s1780, 1
    %1782 = vsyncpa [#allocation4], 1
    %s1783 = scalar_lea.sflag [#allocation4], 1
    %1784 = vsyncpa %s1783, 1
    %1785 = vsyncpa [#allocation7], 1
    %1786 = vsyncpa [#allocation10], 1

</llo_original>
